<compile_context>
chip_gen: v7x
topology: tpu7x:2x2x1
jax: 0.10.0
libtpu: 0.0.40
codegen_flags: <defaults>
</compile_context>

<pallas_src>
import functools
import math

import jax
import jax.numpy as jnp
import numpy as np
from jax.experimental import pallas as pl
from jax.experimental.pallas import tpu as pltpu

# Finite "minus infinity" for additive masks: keeps the online softmax NaN-free
# even when the first kv tile of a row is entirely masked.
_NEG_INF = -1e30


# ---------------------------------------------------------------------------
# helpers
# ---------------------------------------------------------------------------

def _vmem_limit_bytes():
    """3/4 of the chip's VMEM (capped), falling back to a safe 64 MiB."""
    try:
        cap = int(pltpu.get_tpu_info().vmem_capacity_bytes)
    except Exception:
        cap = 0
    if cap <= 0:
        return 64 * 1024 * 1024
    return int(min(100 * 1024 * 1024, (cap * 3) // 4))


def _cparams(dims):
    return pltpu.CompilerParams(dimension_semantics=dims,
                                vmem_limit_bytes=_vmem_limit_bytes())


def _pick_tile(sl, target):
    """Largest tile <= target that evenly divides sl (multiple of 8), else sl."""
    if sl <= target:
        return sl
    for t in range(target, 0, -8):
        if sl % t == 0:
            return t
    return sl  # awkward sl -> single tile; fine for molformer-scale sequences


def _perhead_deinterleave_perm(heads, head_dim):
    """Column permutation: natural layout -> per-head de-interleaved basis
    (within each head: all even pair dims, then all odd pair dims)."""
    half = head_dim // 2
    base = np.arange(heads)[:, None] * head_dim                   # (H, 1)
    even = base + 2 * np.arange(half)[None, :]                    # (H, half)
    odd = even + 1
    return np.concatenate([even, odd], axis=1).reshape(-1)        # (H*hd,)


def rotary_tables(sl, head_dim, *, sm_scale, theta=10000.0, scale_base=512.0):
    """xpos rotary tables, each (sl, head_dim // 2), shared across heads.

    q tables carry xpos and the softmax scale; k tables carry 1/xpos."""
    half_idx = np.arange(0, head_dim, 2, dtype=np.float32)
    inv_freq = 1.0 / (theta ** (half_idx / head_dim))              # (half,)
    t = np.arange(sl, dtype=np.float32)
    freqs = t[:, None] * inv_freq[None, :]                         # (sl, half)
    cos, sin = np.cos(freqs), np.sin(freqs)
    scale_vec = (half_idx + 0.4 * head_dim) / (1.4 * head_dim)     # (half,)
    power = (t - sl // 2) / scale_base                             # (sl,)
    xpos = scale_vec[None, :] ** power[:, None]                    # (sl, half)
    f = lambda a: jnp.asarray(a.astype(np.float32))
    return (f(cos * xpos * sm_scale), f(sin * xpos * sm_scale),
            f(cos / xpos), f(sin / xpos))


# ---------------------------------------------------------------------------
# Pallas kernel: fused QKV projection + xpos rotary (+ softmax scale)
# ---------------------------------------------------------------------------

def _project_rotate(xq, xk, xv, wq_ref, wk_ref, wv_ref,
                    cq_ref, sq_ref, ck_ref, sk_ref,
                    q_ref, k_ref, v_ref, heads, head_dim):
    half = head_dim // 2
    q = jnp.dot(xq, wq_ref[...], preferred_element_type=jnp.float32)
    k = jnp.dot(xk, wk_ref[...], preferred_element_type=jnp.float32)
    v = jnp.dot(xv, wv_ref[...], preferred_element_type=jnp.float32)
    v_ref[0] = v.astype(v_ref.dtype)
    cq, sq = cq_ref[...], sq_ref[...]                    # (tm, half) f32
    ck, sk = ck_ref[...], sk_ref[...]
    qparts, kparts = [], []
    for h in range(heads):
        a0, a1, b1 = h * head_dim, h * head_dim + half, (h + 1) * head_dim
        qa, qb = q[:, a0:a1], q[:, a1:b1]
        ka, kb = k[:, a0:a1], k[:, a1:b1]
        qparts += [qa * cq - qb * sq, qb * cq + qa * sq]
        kparts += [ka * ck - kb * sk, kb * ck + ka * sk]
    q_ref[0] = jnp.concatenate(qparts, axis=-1).astype(q_ref.dtype)
    k_ref[0] = jnp.concatenate(kparts, axis=-1).astype(k_ref.dtype)


def _qkv_rot_fused_kernel(x_ref, wq_ref, wk_ref, wv_ref,
                          cq_ref, sq_ref, ck_ref, sk_ref,
                          q_ref, k_ref, v_ref, *, heads, head_dim):
    x = x_ref[0].astype(jnp.bfloat16)
    _project_rotate(x, x, x, wq_ref, wk_ref, wv_ref, cq_ref, sq_ref, ck_ref,
                    sk_ref, q_ref, k_ref, v_ref, heads, head_dim)


def _qkv_rot_kernel(xq_ref, xk_ref, xv_ref, wq_ref, wk_ref, wv_ref,
                    cq_ref, sq_ref, ck_ref, sk_ref,
                    q_ref, k_ref, v_ref, *, heads, head_dim):
    _project_rotate(xq_ref[0].astype(jnp.bfloat16),
                    xk_ref[0].astype(jnp.bfloat16),
                    xv_ref[0].astype(jnp.bfloat16),
                    wq_ref, wk_ref, wv_ref, cq_ref, sq_ref, ck_ref, sk_ref,
                    q_ref, k_ref, v_ref, heads, head_dim)


def qkv_rot_projection(xq, xk, xv, wq, wk, wv, cq, sq, ck, sk, *,
                       heads, head_dim, tm=512):
    """Projection + rotary in one launch.

    xq/xk/xv: (N, sl, E) f32 (may be the same array for self-attention).
    wq/wk:    (E, E) bf16, (in, out) layout, columns per-head de-interleaved.
    wv:       (E, E) bf16, natural layout.
    cq/sq/ck/sk: (sl, head_dim//2) f32 rotary tables.
    Returns q_rot, k_rot (per-head de-interleaved, scale folded into q) and v,
    each (N, sl, E) bf16."""
    N, sl, E = xq.shape
    half = head_dim // 2
    tm = _pick_tile(sl, tm)
    grid = (N, sl // tm)

    x_spec = pl.BlockSpec((1, tm, E), lambda b, i: (b, i, 0))
    w_spec = pl.BlockSpec((E, E), lambda b, i: (0, 0))
    t_spec = pl.BlockSpec((tm, half), lambda b, i: (i, 0))
    o_spec = pl.BlockSpec((1, tm, E), lambda b, i: (b, i, 0))
    o_shape = jax.ShapeDtypeStruct((N, sl, E), jnp.bfloat16)

    fused = (xq is xk) and (xk is xv)
    if fused:
        kernel = functools.partial(_qkv_rot_fused_kernel, heads=heads,
                                   head_dim=head_dim)
        in_specs = [x_spec, w_spec, w_spec, w_spec,
                    t_spec, t_spec, t_spec, t_spec]
        args = (xq, wq, wk, wv, cq, sq, ck, sk)
        x_bytes = N * sl * E * 4
    else:
        kernel = functools.partial(_qkv_rot_kernel, heads=heads,
                                   head_dim=head_dim)
        in_specs = [x_spec, x_spec, x_spec, w_spec, w_spec, w_spec,
                    t_spec, t_spec, t_spec, t_spec]
        args = (xq, xk, xv, wq, wk, wv, cq, sq, ck, sk)
        x_bytes = 3 * N * sl * E * 4

    cost = pl.CostEstimate(
        flops=6 * N * sl * E * E,
        transcendentals=0,
        bytes_accessed=x_bytes + 3 * E * E * 2 + 3 * N * sl * E * 2)

    return pl.pallas_call(
        kernel,
        out_shape=(o_shape, o_shape, o_shape),
        grid_spec=pltpu.PrefetchScalarGridSpec(
            num_scalar_prefetch=0,
            grid=grid,
            in_specs=in_specs,
            out_specs=(o_spec, o_spec, o_spec)),
        compiler_params=_cparams(("parallel", "parallel")),
        cost_estimate=cost,
    )(*args)


# ---------------------------------------------------------------------------
# Pallas kernel: flash attention (all heads per batch element, rotary prefused)
# ---------------------------------------------------------------------------

def _mha_fwd_kernel(*refs, heads, head_dim, causal, has_kpm, has_bias,
                    bias_per_head, q_tiles):
    q_ref, k_ref, v_ref = refs[0], refs[1], refs[2]
    pos = 3
    kpm_ref = bias_ref = None
    if has_kpm:
        kpm_ref = refs[pos]
        pos += 1
    if has_bias:
        bias_ref = refs[pos]
        pos += 1
    o_ref = refs[pos]
    m_sc, l_sc, acc_sc = refs[pos + 1], refs[pos + 2], refs[pos + 3]

    j = pl.program_id(1)                       # kv tile index (reduction axis)
    qi = pl.program_id(0) % q_tiles            # q tile index within the batch
    tq = q_ref.shape[1]
    tkv = k_ref.shape[1]

    @pl.when(j == 0)
    def _init():
        m_sc[...] = jnp.full_like(m_sc, -jnp.inf)
        l_sc[...] = jnp.zeros_like(l_sc)
        acc_sc[...] = jnp.zeros_like(acc_sc)

    def _compute():
        q = q_ref[0]                           # (tq,  E) bf16, rotated+scaled
        k = k_ref[0]                           # (tkv, E) bf16, rotated
        v = v_ref[0]                           # (tkv, E) bf16
        if causal:
            row = qi * tq + jax.lax.broadcasted_iota(jnp.int32, (tq, tkv), 0)
            col = j * tkv + jax.lax.broadcasted_iota(jnp.int32, (tq, tkv), 1)
            keep = col <= row
        if has_kpm:
            kpm = kpm_ref[0]                   # (1, tkv) additive row

        contract = (((1,), (1,)), ((), ()))
        for h in range(heads):
            hs = slice(h * head_dim, (h + 1) * head_dim)
            # single K = head_dim MXU push per head (q/k are head-contiguous)
            s = jax.lax.dot_general(q[:, hs], k[:, hs], contract,
                                    preferred_element_type=jnp.float32)
            if has_bias:
                s = s + (bias_ref[0, h] if bias_per_head else bias_ref[0, 0])
            if has_kpm:
                s = s + kpm
            if causal:
                s = jnp.where(keep, s, _NEG_INF)

            m_prev = m_sc[:, h:h + 1]                        # (tq, 1)
            m_new = jnp.maximum(m_prev, jnp.max(s, axis=-1, keepdims=True))
            alpha = jnp.exp(m_prev - m_new)
            p = jnp.exp(s - m_new)
            l_sc[:, h:h + 1] = (alpha * l_sc[:, h:h + 1]
                                + jnp.sum(p, axis=-1, keepdims=True))
            acc_sc[:, hs] = alpha * acc_sc[:, hs] + jnp.dot(
                p.astype(jnp.bfloat16), v[:, hs],
                preferred_element_type=jnp.float32)
            m_sc[:, h:h + 1] = m_new

    if causal:
        # Skip all compute for kv tiles entirely above the diagonal.
        @pl.when(j * tkv <= qi * tq + tq - 1)
        def _run():
            _compute()
    else:
        _compute()

    @pl.when(j == pl.num_programs(1) - 1)
    def _finalize():
        parts = []
        for h in range(heads):
            inv_l = pl.reciprocal(l_sc[:, h:h + 1], approx=True)   # (tq, 1)
            parts.append(acc_sc[:, h * head_dim:(h + 1) * head_dim] * inv_l)
        # Single lane-dense full-width store of the q tile.
        o_ref[0] = jnp.concatenate(parts, axis=-1).astype(o_ref.dtype)


def flash_attention(qr, kr, v, *, heads, head_dim, causal=False,
                    kpm=None, bias=None, tq=512, tkv=256):
    """qr/kr: (N, sl, E) bf16 rotated (per-head de-interleaved) q/k; scale is
    pre-folded into qr.  v: (N, sl, E) bf16 natural layout.
    kpm: optional (N, 1, sl) additive f32.  bias: optional (Nb, Hb, sl, sl)
    additive f32 with Nb in {1, N} and Hb in {1, heads} (never pre-broadcast).
    Returns (N, sl, E) bf16 attention output in the natural head layout."""
    N, sl, E = qr.shape
    tq = _pick_tile(sl, tq)
    tkv = _pick_tile(sl, tkv)
    q_tiles = sl // tq
    kv_tiles = sl // tkv
    # Flattened leading axis (batch * q_tiles) for good megacore balance.
    grid = (N * q_tiles, kv_tiles)

    in_specs = [
        pl.BlockSpec((1, tq, E), lambda i, j: (i // q_tiles, i % q_tiles, 0)),
        pl.BlockSpec((1, tkv, E), lambda i, j: (i // q_tiles, j, 0)),
        pl.BlockSpec((1, tkv, E), lambda i, j: (i // q_tiles, j, 0)),
    ]
    args = [qr, kr, v]
    bytes_accessed = 4 * N * sl * E * 2
    if kpm is not None:
        in_specs.append(
            pl.BlockSpec((1, 1, tkv), lambda i, j: (i // q_tiles, 0, j)))
        args.append(kpm)
        bytes_accessed += int(kpm.size) * 4
    bias_per_head = False
    if bias is not None:
        nb, hb = int(bias.shape[0]), int(bias.shape[1])
        bias_per_head = hb != 1
        if nb == 1:
            bmap = lambda i, j: (0, 0, i % q_tiles, j)
        else:
            bmap = lambda i, j: (i // q_tiles, 0, i % q_tiles, j)
        in_specs.append(pl.BlockSpec((1, hb, tq, tkv), bmap))
        args.append(bias)
        bytes_accessed += int(bias.size) * 4

    kernel = functools.partial(
        _mha_fwd_kernel, heads=heads, head_dim=head_dim, causal=causal,
        has_kpm=kpm is not None, has_bias=bias is not None,
        bias_per_head=bias_per_head, q_tiles=q_tiles)

    cost = pl.CostEstimate(
        flops=4 * N * heads * sl * sl * head_dim,
        transcendentals=N * heads * sl * sl,
        bytes_accessed=bytes_accessed)

    return pl.pallas_call(
        kernel,
        out_shape=jax.ShapeDtypeStruct((N, sl, E), jnp.bfloat16),
        grid_spec=pltpu.PrefetchScalarGridSpec(
            num_scalar_prefetch=0,
            grid=grid,
            in_specs=in_specs,
            out_specs=pl.BlockSpec(
                (1, tq, E), lambda i, j: (i // q_tiles, i % q_tiles, 0)),
            scratch_shapes=[
                pltpu.VMEM((tq, 128), jnp.float32),   # running max (col = head)
                pltpu.VMEM((tq, 128), jnp.float32),   # running sum (col = head)
                pltpu.VMEM((tq, E), jnp.float32),     # lane-dense accumulator
            ]),
        compiler_params=_cparams(("parallel", "arbitrary")),
        cost_estimate=cost,
    )(*args)


# ---------------------------------------------------------------------------
# Pallas kernel: output projection (fc_out)
# ---------------------------------------------------------------------------

def _out_proj_kernel(x_ref, w_ref, b_ref, o_ref):
    acc = jnp.dot(x_ref[...], w_ref[...], preferred_element_type=jnp.float32)
    o_ref[...] = (acc + b_ref[...]).astype(o_ref.dtype)


def out_projection(x, w_t, b, *, tm=512):
    """x: (M, E) bf16, w_t: (E, N) bf16, b: (N,) f32 -> (M, N) f32."""
    M, E = x.shape
    n_out = w_t.shape[1]
    tm = min(tm, M)
    cost = pl.CostEstimate(
        flops=2 * M * E * n_out,
        transcendentals=0,
        bytes_accessed=M * E * 2 + E * n_out * 2 + M * n_out * 4)
    return pl.pallas_call(
        _out_proj_kernel,
        out_shape=jax.ShapeDtypeStruct((M, n_out), jnp.float32),
        grid_spec=pltpu.PrefetchScalarGridSpec(
            num_scalar_prefetch=0,
            grid=(pl.cdiv(M, tm),),
            in_specs=[pl.BlockSpec((tm, E), lambda i: (i, 0)),
                      pl.BlockSpec((E, n_out), lambda i: (0, 0)),
                      pl.BlockSpec((1, n_out), lambda i: (0, 0))],
            out_specs=pl.BlockSpec((tm, n_out), lambda i: (i, 0))),
        compiler_params=_cparams(("parallel",)),
        cost_estimate=cost,
    )(x, w_t, b.reshape(1, n_out))


# ---------------------------------------------------------------------------
# Parameters and full forward
# ---------------------------------------------------------------------------

def init_params(key, embed_size):
    """Torch-layout params: w* are (out, in); matmul weights stored as bf16."""
    ks = jax.random.split(key, 5)
    bound = 1.0 / math.sqrt(embed_size)
    u = lambda kk, shape: jax.random.uniform(kk, shape, jnp.float32, -bound, bound)
    return dict(
        wq=u(ks[0], (embed_size, embed_size)).astype(jnp.bfloat16),
        wk=u(ks[1], (embed_size, embed_size)).astype(jnp.bfloat16),
        wv=u(ks[2], (embed_size, embed_size)).astype(jnp.bfloat16),
        wo=u(ks[3], (embed_size, embed_size)).astype(jnp.bfloat16),
        bo=u(ks[4], (embed_size,)),
    )


def multihead_attention(params, q, k, v, heads, attn_mask=None,
                        key_padding_mask=None, is_causal=False):
    N, sl, E = q.shape
    hd = E // heads
    assert hd * heads == E and hd % 2 == 0 and heads <= 128
    sm_scale = 1.0 / math.sqrt(hd)

    # q/k weight columns permuted into the per-head de-interleaved rotary basis
    perm = jnp.asarray(_perhead_deinterleave_perm(heads, hd))
    wq = params["wq"].T[:, perm]
    wk = params["wk"].T[:, perm]
    wv = params["wv"].T

    cq, sq, ck, sk = rotary_tables(sl, hd, sm_scale=sm_scale)

    if (q is k) and (k is v):
        qr, kr, vp = qkv_rot_projection(q, q, q, wq, wk, wv, cq, sq, ck, sk,
                                        heads=heads, head_dim=hd)
    else:
        qr, kr, vp = qkv_rot_projection(q, k, v, wq, wk, wv, cq, sq, ck, sk,
                                        heads=heads, head_dim=hd)

    # Masks -> additive, clamped to a finite negative (NaN-safe online softmax),
    # kept in their broadcastable shapes (never expanded to (N, H, sl, sl)).
    # Boolean masks follow the SDPA convention used by the module: True = attend.
    bias = None
    if attn_mask is not None:
        am = attn_mask
        if am.dtype == jnp.bool_:
            am = jnp.where(am, 0.0, _NEG_INF)
        am = jnp.maximum(am.astype(jnp.float32), _NEG_INF)
        if am.ndim == 2:
            am = am[None, None]
        elif am.ndim == 3:
            am = am.reshape(N, heads, sl, sl)
        bias = am
    kpm = None
    if key_padding_mask is not None:
        km = key_padding_mask
        if km.dtype == jnp.bool_:
            km = jnp.where(km, 0.0, _NEG_INF)
        kpm = jnp.maximum(km.astype(jnp.float32), _NEG_INF).reshape(N, 1, sl)

    attn = flash_attention(qr, kr, vp, heads=heads, head_dim=hd,
                           causal=is_causal, kpm=kpm, bias=bias)   # (N, sl, E)

    out = out_projection(attn.reshape(N * sl, E), params["wo"].T, params["bo"])
    return out.reshape(N, sl, E)


# ---------------------------------------------------------------------------
# Pure-JAX reference (original interleaved rotary convention, bf16 roundings
# placed at the same points as the kernels)
# ---------------------------------------------------------------------------

def reference(params, q, k, v, heads, attn_mask=None, key_padding_mask=None,
              is_causal=False):
    N, sl, E = q.shape
    hd = E // heads
    f32, bf16 = jnp.float32, jnp.bfloat16
    sm_scale = 1.0 / math.sqrt(hd)

    def proj(x, w):
        return jnp.dot(x.reshape(-1, E).astype(bf16), w.T,
                       preferred_element_type=f32).reshape(N, sl, E)

    qp, kp, vp = proj(q, params["wq"]), proj(k, params["wk"]), proj(v, params["wv"])
    split = lambda x: x.reshape(N, sl, heads, hd).transpose(0, 2, 1, 3)
    qh, kh, vh = split(qp), split(kp), split(vp)

    half_idx = np.arange(0, hd, 2, dtype=np.float32)
    inv_freq = 1.0 / (10000.0 ** (half_idx / hd))
    t = np.arange(sl, dtype=np.float32)
    freqs = np.repeat(t[:, None] * inv_freq[None, :], 2, axis=-1)
    cos, sin = jnp.asarray(np.cos(freqs)), jnp.asarray(np.sin(freqs))
    scale_vec = (half_idx + 0.4 * hd) / (1.4 * hd)
    power = (t - sl // 2) / 512.0
    xpos = jnp.asarray(np.repeat(scale_vec[None, :] ** power[:, None], 2, axis=-1))

    def rot_half(x):
        x2 = x.reshape(*x.shape[:-1], hd // 2, 2)
        return jnp.stack([-x2[..., 1], x2[..., 0]], axis=-1).reshape(x.shape)

    q_r = (((qh * cos + rot_half(qh) * sin) * xpos) * sm_scale).astype(bf16)
    k_r = ((kh * cos + rot_half(kh) * sin) / xpos).astype(bf16)

    s = jnp.einsum("bhqd,bhkd->bhqk", q_r, k_r, preferred_element_type=f32)
    bias = jnp.zeros((N, heads, sl, sl), f32)
    if attn_mask is not None:
        am = attn_mask
        if am.dtype == jnp.bool_:
            am = jnp.where(am, 0.0, -jnp.inf)
        am = am.astype(f32)
        if am.ndim == 2:
            am = am[None, None]
        elif am.ndim == 3:
            am = am.reshape(N, heads, sl, sl)
        bias = bias + am
    if key_padding_mask is not None:
        km = key_padding_mask
        if km.dtype == jnp.bool_:
            km = jnp.where(km, 0.0, -jnp.inf)
        bias = bias + km.astype(f32).reshape(N, 1, 1, sl)
    if is_causal:
        bias = bias + jnp.where(jnp.tril(jnp.ones((sl, sl), bool)), 0.0, -jnp.inf)
    p = jax.nn.softmax(s + bias, axis=-1)
    o = jnp.einsum("bhqk,bhkd->bhqd", p.astype(bf16), vh.astype(bf16),
                   preferred_element_type=f32)
    o = o.transpose(0, 2, 1, 3).reshape(N * sl, E).astype(bf16)
    out = jnp.dot(o, params["wo"].T, preferred_element_type=f32) + params["bo"]
    return out.reshape(N, sl, E)


if __name__ == "__main__":
    N, SL, E, H = 2, 8, 32, 4

    root = jax.random.PRNGKey(0)
    kp_, kq_, kk_, kv_ = jax.random.split(root, 4)
    params = init_params(kp_, E)
    q = jax.random.normal(kq_, (N, SL, E), jnp.float32)
    k = jax.random.normal(kk_, (N, SL, E), jnp.float32)
    v = jax.random.normal(kv_, (N, SL, E), jnp.float32)

    # distinct q/k/v, no mask
    out = jax.block_until_ready(multihead_attention(params, q, k, v, heads=H))
    ref = jax.block_until_ready(reference(params, q, k, v, heads=H))
    assert out.shape == (N, SL, E)
    err = float(jnp.max(jnp.abs(out - ref)))
    assert err < 3e-2, f"no-mask mismatch vs reference: {err}"

    # self-attention + causal (fused QKV path, in-kernel masking + tile skip)
    out_c = jax.block_until_ready(
        multihead_attention(params, q, q, q, heads=H, is_causal=True))
    ref_c = jax.block_until_ready(
        reference(params, q, q, q, heads=H, is_causal=True))
    err_c = float(jnp.max(jnp.abs(out_c - ref_c)))
    assert err_c < 3e-2, f"causal mismatch vs reference: {err_c}"

    # key_padding_mask path (boolean, SDPA convention: True = attend)
    kpm_bool = jnp.ones((N, SL), bool).at[1, SL - 2:].set(False)
    out_m = jax.block_until_ready(
        multihead_attention(params, q, k, v, heads=H, key_padding_mask=kpm_bool))
    ref_m = jax.block_until_ready(
        reference(params, q, k, v, heads=H, key_padding_mask=kpm_bool))
    err_m = float(jnp.max(jnp.abs(out_m - ref_m)))
    assert err_m < 3e-2, f"key-padding mismatch vs reference: {err_m}"

    print("KERNEL_OK")
</pallas_src>

<mosaic_0001>
module attributes {stable_mosaic.version = 11 : i64} {
  func.func @_qkv_rot_kernel(%arg0: i32, %arg1: i32, %arg2: memref<1x8x32xf32, #tpu.memory_space<vmem>>, %arg3: memref<1x8x32xf32, #tpu.memory_space<vmem>>, %arg4: memref<1x8x32xf32, #tpu.memory_space<vmem>>, %arg5: memref<32x32xbf16, #tpu.memory_space<vmem>>, %arg6: memref<32x32xbf16, #tpu.memory_space<vmem>>, %arg7: memref<32x32xbf16, #tpu.memory_space<vmem>>, %arg8: memref<8x4xf32, #tpu.memory_space<vmem>>, %arg9: memref<8x4xf32, #tpu.memory_space<vmem>>, %arg10: memref<8x4xf32, #tpu.memory_space<vmem>>, %arg11: memref<8x4xf32, #tpu.memory_space<vmem>>, %arg12: memref<1x8x32xbf16, #tpu.memory_space<vmem>>, %arg13: memref<1x8x32xbf16, #tpu.memory_space<vmem>>, %arg14: memref<1x8x32xbf16, #tpu.memory_space<vmem>>) attributes {dimension_semantics = [#tpu.dimension_semantics<parallel>, #tpu.dimension_semantics<parallel>], iteration_bounds = array<i64: 2, 1>, scalar_prefetch = 0 : i64, scratch_operands = 0 : i64, tpu.core_type = #tpu.core_type<tc>, window_params = [{transform_indices = @transform_0, window_bounds = array<i64: 1, 8, 32>}, {transform_indices = @transform_1, window_bounds = array<i64: 1, 8, 32>}, {transform_indices = @transform_2, window_bounds = array<i64: 1, 8, 32>}, {pipeline_mode = #tpu.pipeline_mode<synchronous>, transform_indices = @transform_3, window_bounds = array<i64: 32, 32>}, {pipeline_mode = #tpu.pipeline_mode<synchronous>, transform_indices = @transform_4, window_bounds = array<i64: 32, 32>}, {pipeline_mode = #tpu.pipeline_mode<synchronous>, transform_indices = @transform_5, window_bounds = array<i64: 32, 32>}, {transform_indices = @transform_6, window_bounds = array<i64: 8, 4>}, {transform_indices = @transform_7, window_bounds = array<i64: 8, 4>}, {transform_indices = @transform_8, window_bounds = array<i64: 8, 4>}, {transform_indices = @transform_9, window_bounds = array<i64: 8, 4>}, {transform_indices = @transform_10, window_bounds = array<i64: 1, 8, 32>}, {transform_indices = @transform_11, window_bounds = array<i64: 1, 8, 32>}, {transform_indices = @transform_12, window_bounds = array<i64: 1, 8, 32>}]} {
    %c0 = arith.constant 0 : index
    %c0_0 = arith.constant 0 : index
    %c0_1 = arith.constant 0 : index
    %0 = vector.load %arg2[%c0, %c0_0, %c0_1] : memref<1x8x32xf32, #tpu.memory_space<vmem>>, vector<1x8x32xf32>
    %1 = vector.shape_cast %0 : vector<1x8x32xf32> to vector<8x32xf32>
    %2 = arith.truncf %1 : vector<8x32xf32> to vector<8x32xbf16>
    %c0_2 = arith.constant 0 : index
    %c0_3 = arith.constant 0 : index
    %c0_4 = arith.constant 0 : index
    %3 = vector.load %arg3[%c0_2, %c0_3, %c0_4] : memref<1x8x32xf32, #tpu.memory_space<vmem>>, vector<1x8x32xf32>
    %4 = vector.shape_cast %3 : vector<1x8x32xf32> to vector<8x32xf32>
    %5 = arith.truncf %4 : vector<8x32xf32> to vector<8x32xbf16>
    %c0_5 = arith.constant 0 : index
    %c0_6 = arith.constant 0 : index
    %c0_7 = arith.constant 0 : index
    %6 = vector.load %arg4[%c0_5, %c0_6, %c0_7] : memref<1x8x32xf32, #tpu.memory_space<vmem>>, vector<1x8x32xf32>
    %7 = vector.shape_cast %6 : vector<1x8x32xf32> to vector<8x32xf32>
    %8 = arith.truncf %7 : vector<8x32xf32> to vector<8x32xbf16>
    %c0_8 = arith.constant 0 : index
    %c0_9 = arith.constant 0 : index
    %9 = vector.load %arg5[%c0_8, %c0_9] : memref<32x32xbf16, #tpu.memory_space<vmem>>, vector<32x32xbf16>
    %cst = arith.constant dense<0.000000e+00> : vector<8x32xf32>
    %10 = tpu.matmul %2, %9, %cst {dimension_numbers = #tpu.dot_dimension_numbers<[1], [0], [0], [1], [0, 0, 1, 1], [], []>} : vector<8x32xbf16>, vector<32x32xbf16>, vector<8x32xf32> -> vector<8x32xf32>
    %c0_10 = arith.constant 0 : index
    %c0_11 = arith.constant 0 : index
    %11 = vector.load %arg6[%c0_10, %c0_11] : memref<32x32xbf16, #tpu.memory_space<vmem>>, vector<32x32xbf16>
    %cst_12 = arith.constant dense<0.000000e+00> : vector<8x32xf32>
    %12 = tpu.matmul %5, %11, %cst_12 {dimension_numbers = #tpu.dot_dimension_numbers<[1], [0], [0], [1], [0, 0, 1, 1], [], []>} : vector<8x32xbf16>, vector<32x32xbf16>, vector<8x32xf32> -> vector<8x32xf32>
    %c0_13 = arith.constant 0 : index
    %c0_14 = arith.constant 0 : index
    %13 = vector.load %arg7[%c0_13, %c0_14] : memref<32x32xbf16, #tpu.memory_space<vmem>>, vector<32x32xbf16>
    %cst_15 = arith.constant dense<0.000000e+00> : vector<8x32xf32>
    %14 = tpu.matmul %8, %13, %cst_15 {dimension_numbers = #tpu.dot_dimension_numbers<[1], [0], [0], [1], [0, 0, 1, 1], [], []>} : vector<8x32xbf16>, vector<32x32xbf16>, vector<8x32xf32> -> vector<8x32xf32>
    %15 = arith.truncf %14 : vector<8x32xf32> to vector<8x32xbf16>
    %c0_16 = arith.constant 0 : index
    %c0_17 = arith.constant 0 : index
    %c0_18 = arith.constant 0 : index
    %16 = vector.load %arg14[%c0_16, %c0_17, %c0_18] : memref<1x8x32xbf16, #tpu.memory_space<vmem>>, vector<1x8x32xbf16>
    %17 = vector.shape_cast %16 : vector<1x8x32xbf16> to vector<8x32xbf16>
    %18 = vector.shape_cast %15 : vector<8x32xbf16> to vector<1x8x32xbf16>
    tpu.vector_store %arg14[%c0_16, %c0_17, %c0_18], %18 {strides = array<i32>} : memref<1x8x32xbf16, #tpu.memory_space<vmem>>, vector<1x8x32xbf16>,
    %c0_19 = arith.constant 0 : index
    %c0_20 = arith.constant 0 : index
    %19 = vector.load %arg8[%c0_19, %c0_20] : memref<8x4xf32, #tpu.memory_space<vmem>>, vector<8x4xf32>
    %c0_21 = arith.constant 0 : index
    %c0_22 = arith.constant 0 : index
    %20 = vector.load %arg9[%c0_21, %c0_22] : memref<8x4xf32, #tpu.memory_space<vmem>>, vector<8x4xf32>
    %c0_23 = arith.constant 0 : index
    %c0_24 = arith.constant 0 : index
    %21 = vector.load %arg10[%c0_23, %c0_24] : memref<8x4xf32, #tpu.memory_space<vmem>>, vector<8x4xf32>
    %c0_25 = arith.constant 0 : index
    %c0_26 = arith.constant 0 : index
    %22 = vector.load %arg11[%c0_25, %c0_26] : memref<8x4xf32, #tpu.memory_space<vmem>>, vector<8x4xf32>
    %23 = vector.extract_strided_slice %10 {offsets = [0, 0], sizes = [8, 4], strides = [1, 1]} : vector<8x32xf32> to vector<8x4xf32>
    %24 = vector.extract_strided_slice %10 {offsets = [0, 4], sizes = [8, 4], strides = [1, 1]} : vector<8x32xf32> to vector<8x4xf32>
    %25 = vector.extract_strided_slice %12 {offsets = [0, 0], sizes = [8, 4], strides = [1, 1]} : vector<8x32xf32> to vector<8x4xf32>
    %26 = vector.extract_strided_slice %12 {offsets = [0, 4], sizes = [8, 4], strides = [1, 1]} : vector<8x32xf32> to vector<8x4xf32>
    %27 = arith.mulf %23, %19 : vector<8x4xf32>
    %28 = arith.mulf %24, %20 : vector<8x4xf32>
    %29 = arith.subf %27, %28 : vector<8x4xf32>
    %30 = arith.mulf %24, %19 : vector<8x4xf32>
    %31 = arith.mulf %23, %20 : vector<8x4xf32>
    %32 = arith.addf %30, %31 : vector<8x4xf32>
    %33 = arith.mulf %25, %21 : vector<8x4xf32>
    %34 = arith.mulf %26, %22 : vector<8x4xf32>
    %35 = arith.subf %33, %34 : vector<8x4xf32>
    %36 = arith.mulf %26, %21 : vector<8x4xf32>
    %37 = arith.mulf %25, %22 : vector<8x4xf32>
    %38 = arith.addf %36, %37 : vector<8x4xf32>
    %39 = vector.extract_strided_slice %10 {offsets = [0, 8], sizes = [8, 4], strides = [1, 1]} : vector<8x32xf32> to vector<8x4xf32>
    %40 = vector.extract_strided_slice %10 {offsets = [0, 12], sizes = [8, 4], strides = [1, 1]} : vector<8x32xf32> to vector<8x4xf32>
    %41 = vector.extract_strided_slice %12 {offsets = [0, 8], sizes = [8, 4], strides = [1, 1]} : vector<8x32xf32> to vector<8x4xf32>
    %42 = vector.extract_strided_slice %12 {offsets = [0, 12], sizes = [8, 4], strides = [1, 1]} : vector<8x32xf32> to vector<8x4xf32>
    %43 = arith.mulf %39, %19 : vector<8x4xf32>
    %44 = arith.mulf %40, %20 : vector<8x4xf32>
    %45 = arith.subf %43, %44 : vector<8x4xf32>
    %46 = arith.mulf %40, %19 : vector<8x4xf32>
    %47 = arith.mulf %39, %20 : vector<8x4xf32>
    %48 = arith.addf %46, %47 : vector<8x4xf32>
    %49 = arith.mulf %41, %21 : vector<8x4xf32>
    %50 = arith.mulf %42, %22 : vector<8x4xf32>
    %51 = arith.subf %49, %50 : vector<8x4xf32>
    %52 = arith.mulf %42, %21 : vector<8x4xf32>
    %53 = arith.mulf %41, %22 : vector<8x4xf32>
    %54 = arith.addf %52, %53 : vector<8x4xf32>
    %55 = vector.extract_strided_slice %10 {offsets = [0, 16], sizes = [8, 4], strides = [1, 1]} : vector<8x32xf32> to vector<8x4xf32>
    %56 = vector.extract_strided_slice %10 {offsets = [0, 20], sizes = [8, 4], strides = [1, 1]} : vector<8x32xf32> to vector<8x4xf32>
    %57 = vector.extract_strided_slice %12 {offsets = [0, 16], sizes = [8, 4], strides = [1, 1]} : vector<8x32xf32> to vector<8x4xf32>
    %58 = vector.extract_strided_slice %12 {offsets = [0, 20], sizes = [8, 4], strides = [1, 1]} : vector<8x32xf32> to vector<8x4xf32>
    %59 = arith.mulf %55, %19 : vector<8x4xf32>
    %60 = arith.mulf %56, %20 : vector<8x4xf32>
    %61 = arith.subf %59, %60 : vector<8x4xf32>
    %62 = arith.mulf %56, %19 : vector<8x4xf32>
    %63 = arith.mulf %55, %20 : vector<8x4xf32>
    %64 = arith.addf %62, %63 : vector<8x4xf32>
    %65 = arith.mulf %57, %21 : vector<8x4xf32>
    %66 = arith.mulf %58, %22 : vector<8x4xf32>
    %67 = arith.subf %65, %66 : vector<8x4xf32>
    %68 = arith.mulf %58, %21 : vector<8x4xf32>
    %69 = arith.mulf %57, %22 : vector<8x4xf32>
    %70 = arith.addf %68, %69 : vector<8x4xf32>
    %71 = vector.extract_strided_slice %10 {offsets = [0, 24], sizes = [8, 4], strides = [1, 1]} : vector<8x32xf32> to vector<8x4xf32>
    %72 = vector.extract_strided_slice %10 {offsets = [0, 28], sizes = [8, 4], strides = [1, 1]} : vector<8x32xf32> to vector<8x4xf32>
    %73 = vector.extract_strided_slice %12 {offsets = [0, 24], sizes = [8, 4], strides = [1, 1]} : vector<8x32xf32> to vector<8x4xf32>
    %74 = vector.extract_strided_slice %12 {offsets = [0, 28], sizes = [8, 4], strides = [1, 1]} : vector<8x32xf32> to vector<8x4xf32>
    %75 = arith.mulf %71, %19 : vector<8x4xf32>
    %76 = arith.mulf %72, %20 : vector<8x4xf32>
    %77 = arith.subf %75, %76 : vector<8x4xf32>
    %78 = arith.mulf %72, %19 : vector<8x4xf32>
    %79 = arith.mulf %71, %20 : vector<8x4xf32>
    %80 = arith.addf %78, %79 : vector<8x4xf32>
    %81 = arith.mulf %73, %21 : vector<8x4xf32>
    %82 = arith.mulf %74, %22 : vector<8x4xf32>
    %83 = arith.subf %81, %82 : vector<8x4xf32>
    %84 = arith.mulf %74, %21 : vector<8x4xf32>
    %85 = arith.mulf %73, %22 : vector<8x4xf32>
    %86 = arith.addf %84, %85 : vector<8x4xf32>
    %87 = tpu.concatenate %29, %32, %45, %48, %61, %64, %77, %80 in 1 : vector<8x4xf32>, vector<8x4xf32>, vector<8x4xf32>, vector<8x4xf32>, vector<8x4xf32>, vector<8x4xf32>, vector<8x4xf32>, vector<8x4xf32> -> vector<8x32xf32>
    %88 = arith.truncf %87 : vector<8x32xf32> to vector<8x32xbf16>
    %c0_27 = arith.constant 0 : index
    %c0_28 = arith.constant 0 : index
    %c0_29 = arith.constant 0 : index
    %89 = vector.load %arg12[%c0_27, %c0_28, %c0_29] : memref<1x8x32xbf16, #tpu.memory_space<vmem>>, vector<1x8x32xbf16>
    %90 = vector.shape_cast %89 : vector<1x8x32xbf16> to vector<8x32xbf16>
    %91 = vector.shape_cast %88 : vector<8x32xbf16> to vector<1x8x32xbf16>
    tpu.vector_store %arg12[%c0_27, %c0_28, %c0_29], %91 {strides = array<i32>} : memref<1x8x32xbf16, #tpu.memory_space<vmem>>, vector<1x8x32xbf16>,
    %92 = tpu.concatenate %35, %38, %51, %54, %67, %70, %83, %86 in 1 : vector<8x4xf32>, vector<8x4xf32>, vector<8x4xf32>, vector<8x4xf32>, vector<8x4xf32>, vector<8x4xf32>, vector<8x4xf32>, vector<8x4xf32> -> vector<8x32xf32>
    %93 = arith.truncf %92 : vector<8x32xf32> to vector<8x32xbf16>
    %c0_30 = arith.constant 0 : index
    %c0_31 = arith.constant 0 : index
    %c0_32 = arith.constant 0 : index
    %94 = vector.load %arg13[%c0_30, %c0_31, %c0_32] : memref<1x8x32xbf16, #tpu.memory_space<vmem>>, vector<1x8x32xbf16>
    %95 = vector.shape_cast %94 : vector<1x8x32xbf16> to vector<8x32xbf16>
    %96 = vector.shape_cast %93 : vector<8x32xbf16> to vector<1x8x32xbf16>
    tpu.vector_store %arg13[%c0_30, %c0_31, %c0_32], %96 {strides = array<i32>} : memref<1x8x32xbf16, #tpu.memory_space<vmem>>, vector<1x8x32xbf16>,
    return
  }
  func.func @transform_0(%arg0: i32, %arg1: i32) -> (i32, i32, i32) {
    %c0_i32 = arith.constant 0 : i32
    %c0_i32_0 = arith.constant 0 : i32
    return %arg0, %arg1, %c0_i32 : i32, i32, i32
  }
  func.func @transform_1(%arg0: i32, %arg1: i32) -> (i32, i32, i32) {
    %c0_i32 = arith.constant 0 : i32
    %c0_i32_0 = arith.constant 0 : i32
    return %arg0, %arg1, %c0_i32 : i32, i32, i32
  }
  func.func @transform_2(%arg0: i32, %arg1: i32) -> (i32, i32, i32) {
    %c0_i32 = arith.constant 0 : i32
    %c0_i32_0 = arith.constant 0 : i32
    return %arg0, %arg1, %c0_i32 : i32, i32, i32
  }
  func.func @transform_3(%arg0: i32, %arg1: i32) -> (i32, i32) {
    %c0_i32 = arith.constant 0 : i32
    %c0_i32_0 = arith.constant 0 : i32
    %c0_i32_1 = arith.constant 0 : i32
    return %c0_i32, %c0_i32_0 : i32, i32
  }
  func.func @transform_4(%arg0: i32, %arg1: i32) -> (i32, i32) {
    %c0_i32 = arith.constant 0 : i32
    %c0_i32_0 = arith.constant 0 : i32
    %c0_i32_1 = arith.constant 0 : i32
    return %c0_i32, %c0_i32_0 : i32, i32
  }
  func.func @transform_5(%arg0: i32, %arg1: i32) -> (i32, i32) {
    %c0_i32 = arith.constant 0 : i32
    %c0_i32_0 = arith.constant 0 : i32
    %c0_i32_1 = arith.constant 0 : i32
    return %c0_i32, %c0_i32_0 : i32, i32
  }
  func.func @transform_6(%arg0: i32, %arg1: i32) -> (i32, i32) {
    %c0_i32 = arith.constant 0 : i32
    %c0_i32_0 = arith.constant 0 : i32
    return %arg1, %c0_i32 : i32, i32
  }
  func.func @transform_7(%arg0: i32, %arg1: i32) -> (i32, i32) {
    %c0_i32 = arith.constant 0 : i32
    %c0_i32_0 = arith.constant 0 : i32
    return %arg1, %c0_i32 : i32, i32
  }
  func.func @transform_8(%arg0: i32, %arg1: i32) -> (i32, i32) {
    %c0_i32 = arith.constant 0 : i32
    %c0_i32_0 = arith.constant 0 : i32
    return %arg1, %c0_i32 : i32, i32
  }
  func.func @transform_9(%arg0: i32, %arg1: i32) -> (i32, i32) {
    %c0_i32 = arith.constant 0 : i32
    %c0_i32_0 = arith.constant 0 : i32
    return %arg1, %c0_i32 : i32, i32
  }
  func.func @transform_10(%arg0: i32, %arg1: i32) -> (i32, i32, i32) {
    %c0_i32 = arith.constant 0 : i32
    %c0_i32_0 = arith.constant 0 : i32
    return %arg0, %arg1, %c0_i32 : i32, i32, i32
  }
  func.func @transform_11(%arg0: i32, %arg1: i32) -> (i32, i32, i32) {
    %c0_i32 = arith.constant 0 : i32
    %c0_i32_0 = arith.constant 0 : i32
    return %arg0, %arg1, %c0_i32 : i32, i32, i32
  }
  func.func @transform_12(%arg0: i32, %arg1: i32) -> (i32, i32, i32) {
    %c0_i32 = arith.constant 0 : i32
    %c0_i32_0 = arith.constant 0 : i32
    return %arg0, %arg1, %c0_i32 : i32, i32, i32
  }
}

</mosaic_0001>

<llo_original>
// kernel: tpu_custom_call.1
$region0: #{tpu_custom_call.1}
  #allocation0 [shape = 'u32[]', space=smem, size = 0x4, offset = 0x4, fixed_abs, tag = 'smem constant byte address 0x4 - core index']
  #allocation1 [shape = 'u32[144,128]{1,0:T(1,128)}', space=vmem, size = 0x12000, scoped, tag = 'internal scratch']
  %s0 = inlined_call_operand.hbm [shape: f32[2,8,32], index: 0, kind: input, shape index: {}]
  %s1 = inlined_call_operand.hbm [shape: f32[2,8,32], index: 1, kind: input, shape index: {}]
  %s2 = inlined_call_operand.hbm [shape: f32[2,8,32], index: 2, kind: input, shape index: {}]
  %s3 = inlined_call_operand.hbm [shape: bf16[32,32], index: 3, kind: input, shape index: {}]
  %s4 = inlined_call_operand.hbm [shape: bf16[32,32], index: 4, kind: input, shape index: {}]
  %s5 = inlined_call_operand.hbm [shape: bf16[32,32], index: 5, kind: input, shape index: {}]
  %s6 = inlined_call_operand.hbm [shape: f32[8,4], index: 6, kind: input, shape index: {}]
  %s7 = inlined_call_operand.hbm [shape: f32[8,4], index: 7, kind: input, shape index: {}]
  %s8 = inlined_call_operand.hbm [shape: f32[8,4], index: 8, kind: input, shape index: {}]
  %s9 = inlined_call_operand.hbm [shape: f32[8,4], index: 9, kind: input, shape index: {}]
  %s10 = inlined_call_operand.hbm [shape: bf16[2,8,32], index: 10, kind: output, shape index: {0}]
  %s11 = inlined_call_operand.hbm [shape: bf16[2,8,32], index: 11, kind: output, shape index: {1}]
  %s12 = inlined_call_operand.hbm [shape: bf16[2,8,32], index: 12, kind: output, shape index: {2}]
  %13 = xla_tuple %s10, %s11, %s12
  %s14 = sld [smem:[#allocation0]]
  $region129: #{tpu_custom_call.1} parent=0
    _
  %s16 = ssub.s32 1, %s14
  %s17 = scalar_select 0, %s16, %s14
  $region1: #{tpu_custom_call.1} parent=0
    #allocation2 [shape = 'u8[8192]{0}', space=vmem, size = 0x2000, scoped, tag = 'input window, operand 0']
    #allocation3 [shape = 's32[2]{0}', space=sflag, size = 0x8, scoped, tag = 'scoped memory for tpu_custom_call.1']
    #allocation4 [shape = 's32[2]{0}', space=sflag, size = 0x8, scoped, tag = 'scoped memory for tpu_custom_call.1']
    #allocation5 [shape = 'u8[8192]{0}', space=vmem, size = 0x2000, scoped, tag = 'input window, operand 1']
    #allocation6 [shape = 's32[2]{0}', space=sflag, size = 0x8, scoped, tag = 'scoped memory for tpu_custom_call.1']
    #allocation7 [shape = 'u8[8192]{0}', space=vmem, size = 0x2000, scoped, tag = 'input window, operand 2']
    #allocation8 [shape = 'u8[8192]{0}', space=vmem, size = 0x2000, scoped, tag = 'input window, operand 3, single buffered']
    #allocation9 [shape = 's32[1]{0}', space=sflag, size = 0x4, scoped, tag = 'scoped memory for tpu_custom_call.1']
    #allocation10 [shape = 'u8[8192]{0}', space=vmem, size = 0x2000, scoped, tag = 'input window, operand 4, single buffered']
    #allocation11 [shape = 'u8[8192]{0}', space=vmem, size = 0x2000, scoped, tag = 'input window, operand 5, single buffered']
    #allocation12 [shape = 's32[1]{0}', space=sflag, size = 0x4, scoped, tag = 'scoped memory for tpu_custom_call.1']
    #allocation13 [shape = 'u8[4096]{0}', space=vmem, size = 0x1000, scoped, tag = 'input window, operand 6, single buffered']
    #allocation14 [shape = 'u8[4096]{0}', space=vmem, size = 0x1000, scoped, tag = 'input window, operand 7, single buffered']
    #allocation15 [shape = 's32[1]{0}', space=sflag, size = 0x4, scoped, tag = 'scoped memory for tpu_custom_call.1']
    #allocation16 [shape = 'u8[4096]{0}', space=vmem, size = 0x1000, scoped, tag = 'input window, operand 8, single buffered']
    #allocation17 [shape = 'u8[4096]{0}', space=vmem, size = 0x1000, scoped, tag = 'input window, operand 9, single buffered']
    #allocation18 [shape = 's32[1]{0}', space=sflag, size = 0x4, scoped, tag = 'scoped memory for tpu_custom_call.1']
    #allocation19 [shape = 'u8[4096]{0}', space=vmem, size = 0x1000, scoped, tag = 'output window, operand 0']
    #allocation20 [shape = 'u8[4096]{0}', space=vmem, size = 0x1000, scoped, tag = 'output window, operand 1']
    #allocation21 [shape = 's32[2]{0}', space=sflag, size = 0x8, scoped, tag = 'scoped memory for tpu_custom_call.1']
    #allocation22 [shape = 'u8[4096]{0}', space=vmem, size = 0x1000, scoped, tag = 'output window, operand 2']
    %18 = vsyncpa [#allocation3], 0
    %s19 = scalar_lea.sflag [#allocation3], 1
    %20 = vsyncpa %s19, 0
    %21 = vsyncpa [#allocation6], 0
    %s22 = scalar_lea.sflag [#allocation6], 1
    %23 = vsyncpa %s22, 0
    %24 = vsyncpa [#allocation9], 0
    %25 = vsyncpa [#allocation12], 0
    %26 = vsyncpa [#allocation15], 0
    %27 = vsyncpa [#allocation18], 0
    %28 = vsyncpa [#allocation4], 0
    %s29 = scalar_lea.sflag [#allocation4], 1
    %30 = vsyncpa %s29, 0
    %31 = vsyncpa [#allocation21], 0
    %s32 = scalar_lea.sflag [#allocation21], 1
    %33 = vsyncpa %s32, 0
    loop: start=0, step=1, limit=4
    $region2: #{tpu_custom_call.1} parent=1 // loop_pre_header
      _
    $region3: #{tpu_custom_call.1} parent=1 // loop_header
      %s35 = sphi 0, %s39
      %p36 = scmp.ge.s32.totalorder %s35, 4
      %s42 = sphi 0, %s54
      %s43 = sphi 0, %s50
      %s44 = sphi 0, %s42
      %s45 = sphi 0, %s43
      %s46 = sphi 0, %s44
      %s47 = sphi 0, %s45
      %s59 = sphi 0, %s61
      %s62 = sphi 0, %s59
      %s63 = sphi 0, %s62
      %s79 = sphi 0, %s63
      %s87 = sphi 0, %s89
      %s90 = sphi 0, %s87
      %s91 = sphi 0, %s90
      %s107 = sphi 0, %s91
      %s115 = sphi 0, %s117
      %s118 = sphi 0, %s115
      %s119 = sphi 0, %s118
      %s135 = sphi 0, %s119
      %s139 = sphi 0, %s139
      %s141 = sphi 0, %s139
      %s142 = sphi 0, %s141
      %s156 = sphi 0, %s142
      %s160 = sphi 0, %s160
      %s162 = sphi 0, %s160
      %s163 = sphi 0, %s162
      %s177 = sphi 0, %s163
      %s181 = sphi 0, %s181
      %s183 = sphi 0, %s181
      %s184 = sphi 0, %s183
      %s198 = sphi 0, %s184
      %s204 = sphi 0, %s206
      %s207 = sphi 0, %s204
      %s208 = sphi 0, %s207
      %s224 = sphi 0, %s208
      %s230 = sphi 0, %s232
      %s233 = sphi 0, %s230
      %s234 = sphi 0, %s233
      %s250 = sphi 0, %s234
      %s256 = sphi 0, %s258
      %s259 = sphi 0, %s256
      %s260 = sphi 0, %s259
      %s276 = sphi 0, %s260
      %s282 = sphi 0, %s284
      %s285 = sphi 0, %s282
      %s286 = sphi 0, %s285
      %s302 = sphi 0, %s286
      %s310 = sphi 0, %s312
      %s313 = sphi 0, %s310
      %s314 = sphi 0, %s313
      %s330 = sphi 0, %s314
      %s338 = sphi 0, %s340
      %s341 = sphi 0, %s338
      %s342 = sphi 0, %s341
      %s358 = sphi 0, %s342
      %s366 = sphi 0, %s368
      %s369 = sphi 0, %s366
      %s370 = sphi 0, %s369
      %s386 = sphi 0, %s370
    $region4: #{tpu_custom_call.1} parent=1 // loop_header_branch
      %38 = sbr.rel (%p36) target = $region8
    $region5: #{tpu_custom_call.1} parent=1 // loop_body
      %s40 = ssub.s32 %s35, 1
      %s41 = ssub.s32 %s35, 2
      %s48 = sadd.s32 1, %s43
      %p49 = scmp.ge.s32.totalorder %s48, 1
      %s50 = scalar_select %p49, 0, %s48
      %s51 = sadd.s32 1, %s42
      %s52 = scalar_select %p49, %s51, %s42
      %p53 = scmp.ge.s32.totalorder %s52, 2
      %s54 = scalar_select %p53, 0, %s52
      %s55 = ssub.s32 %s42, %s54
      %s56 = ssub.s32 %s43, %s50
      %s57 = sor.u32 %s55, %s56
      %p58 = scmp.eq.s32.totalorder %s57, 0
      %s60 = sadd.s32 %s59, 1
      %s61 = scalar_select %p58, %s59, %s60
      %p64 = pneg %p58
      %p65 = scmp.eq.s32.totalorder %s35, 1
      %p66 = por %p64, %p65
      %p67 = scmp.ne.s32.totalorder %s59, %s62
      %p68 = scmp.eq.s32.totalorder %s35, 0
      %p69 = por %p67, %p68
      %p70 = scmp.ne.s32.totalorder %s59, %s62
      %p71 = scmp.eq.s32.totalorder %s40, 1
      %p72 = por %p70, %p71
      %p73 = scmp.ne.s32.totalorder %s62, %s63
      %p74 = scmp.eq.s32.totalorder %s40, 0
      %p75 = por %p73, %p74
      %p76 = scmp.ne.s32.totalorder %s62, %s63
      %p77 = scmp.eq.s32.totalorder %s41, 1
      %p78 = por %p76, %p77
      %p80 = scmp.ne.s32.totalorder %s63, %s79
      %p81 = scmp.eq.s32.totalorder %s41, 0
      %p82 = por %p80, %p81
      %s83 = ssub.s32 %s42, %s54
      %s84 = ssub.s32 %s43, %s50
      %s85 = sor.u32 %s83, %s84
      %p86 = scmp.eq.s32.totalorder %s85, 0
      %s88 = sadd.s32 %s87, 1
      %s89 = scalar_select %p86, %s87, %s88
      %p92 = pneg %p86
      %p93 = scmp.eq.s32.totalorder %s35, 1
      %p94 = por %p92, %p93
      %p95 = scmp.ne.s32.totalorder %s87, %s90
      %p96 = scmp.eq.s32.totalorder %s35, 0
      %p97 = por %p95, %p96
      %p98 = scmp.ne.s32.totalorder %s87, %s90
      %p99 = scmp.eq.s32.totalorder %s40, 1
      %p100 = por %p98, %p99
      %p101 = scmp.ne.s32.totalorder %s90, %s91
      %p102 = scmp.eq.s32.totalorder %s40, 0
      %p103 = por %p101, %p102
      %p104 = scmp.ne.s32.totalorder %s90, %s91
      %p105 = scmp.eq.s32.totalorder %s41, 1
      %p106 = por %p104, %p105
      %p108 = scmp.ne.s32.totalorder %s91, %s107
      %p109 = scmp.eq.s32.totalorder %s41, 0
      %p110 = por %p108, %p109
      %s111 = ssub.s32 %s42, %s54
      %s112 = ssub.s32 %s43, %s50
      %s113 = sor.u32 %s111, %s112
      %p114 = scmp.eq.s32.totalorder %s113, 0
      %s116 = sadd.s32 %s115, 1
      %s117 = scalar_select %p114, %s115, %s116
      %p120 = pneg %p114
      %p121 = scmp.eq.s32.totalorder %s35, 1
      %p122 = por %p120, %p121
      %p123 = scmp.ne.s32.totalorder %s115, %s118
      %p124 = scmp.eq.s32.totalorder %s35, 0
      %p125 = por %p123, %p124
      %p126 = scmp.ne.s32.totalorder %s115, %s118
      %p127 = scmp.eq.s32.totalorder %s40, 1
      %p128 = por %p126, %p127
      %p129 = scmp.ne.s32.totalorder %s118, %s119
      %p130 = scmp.eq.s32.totalorder %s40, 0
      %p131 = por %p129, %p130
      %p132 = scmp.ne.s32.totalorder %s118, %s119
      %p133 = scmp.eq.s32.totalorder %s41, 1
      %p134 = por %p132, %p133
      %p136 = scmp.ne.s32.totalorder %s119, %s135
      %p137 = scmp.eq.s32.totalorder %s41, 0
      %p138 = por %p136, %p137
      %s140 = sadd.s32 %s139, 1
      %p143 = scmp.eq.s32.totalorder %s35, 1
      %p144 = scmp.ne.s32.totalorder %s139, %s141
      %p145 = scmp.eq.s32.totalorder %s35, 0
      %p146 = por %p144, %p145
      %p147 = scmp.ne.s32.totalorder %s139, %s141
      %p148 = scmp.eq.s32.totalorder %s40, 1
      %p149 = por %p147, %p148
      %p150 = scmp.ne.s32.totalorder %s141, %s142
      %p151 = scmp.eq.s32.totalorder %s40, 0
      %p152 = por %p150, %p151
      %p153 = scmp.ne.s32.totalorder %s141, %s142
      %p154 = scmp.eq.s32.totalorder %s41, 1
      %p155 = por %p153, %p154
      %p157 = scmp.ne.s32.totalorder %s142, %s156
      %p158 = scmp.eq.s32.totalorder %s41, 0
      %p159 = por %p157, %p158
      %s161 = sadd.s32 %s160, 1
      %p164 = scmp.eq.s32.totalorder %s35, 1
      %p165 = scmp.ne.s32.totalorder %s160, %s162
      %p166 = scmp.eq.s32.totalorder %s35, 0
      %p167 = por %p165, %p166
      %p168 = scmp.ne.s32.totalorder %s160, %s162
      %p169 = scmp.eq.s32.totalorder %s40, 1
      %p170 = por %p168, %p169
      %p171 = scmp.ne.s32.totalorder %s162, %s163
      %p172 = scmp.eq.s32.totalorder %s40, 0
      %p173 = por %p171, %p172
      %p174 = scmp.ne.s32.totalorder %s162, %s163
      %p175 = scmp.eq.s32.totalorder %s41, 1
      %p176 = por %p174, %p175
      %p178 = scmp.ne.s32.totalorder %s163, %s177
      %p179 = scmp.eq.s32.totalorder %s41, 0
      %p180 = por %p178, %p179
      %s182 = sadd.s32 %s181, 1
      %p185 = scmp.eq.s32.totalorder %s35, 1
      %p186 = scmp.ne.s32.totalorder %s181, %s183
      %p187 = scmp.eq.s32.totalorder %s35, 0
      %p188 = por %p186, %p187
      %p189 = scmp.ne.s32.totalorder %s181, %s183
      %p190 = scmp.eq.s32.totalorder %s40, 1
      %p191 = por %p189, %p190
      %p192 = scmp.ne.s32.totalorder %s183, %s184
      %p193 = scmp.eq.s32.totalorder %s40, 0
      %p194 = por %p192, %p193
      %p195 = scmp.ne.s32.totalorder %s183, %s184
      %p196 = scmp.eq.s32.totalorder %s41, 1
      %p197 = por %p195, %p196
      %p199 = scmp.ne.s32.totalorder %s184, %s198
      %p200 = scmp.eq.s32.totalorder %s41, 0
      %p201 = por %p199, %p200
      %s202 = ssub.s32 %s43, %s50
      %p203 = scmp.eq.s32.totalorder %s202, 0
      %s205 = sadd.s32 %s204, 1
      %s206 = scalar_select %p203, %s204, %s205
      %p209 = pneg %p203
      %p210 = scmp.eq.s32.totalorder %s35, 1
      %p211 = por %p209, %p210
      %p212 = scmp.ne.s32.totalorder %s204, %s207
      %p213 = scmp.eq.s32.totalorder %s35, 0
      %p214 = por %p212, %p213
      %p215 = scmp.ne.s32.totalorder %s204, %s207
      %p216 = scmp.eq.s32.totalorder %s40, 1
      %p217 = por %p215, %p216
      %p218 = scmp.ne.s32.totalorder %s207, %s208
      %p219 = scmp.eq.s32.totalorder %s40, 0
      %p220 = por %p218, %p219
      %p221 = scmp.ne.s32.totalorder %s207, %s208
      %p222 = scmp.eq.s32.totalorder %s41, 1
      %p223 = por %p221, %p222
      %p225 = scmp.ne.s32.totalorder %s208, %s224
      %p226 = scmp.eq.s32.totalorder %s41, 0
      %p227 = por %p225, %p226
      %s228 = ssub.s32 %s43, %s50
      %p229 = scmp.eq.s32.totalorder %s228, 0
      %s231 = sadd.s32 %s230, 1
      %s232 = scalar_select %p229, %s230, %s231
      %p235 = pneg %p229
      %p236 = scmp.eq.s32.totalorder %s35, 1
      %p237 = por %p235, %p236
      %p238 = scmp.ne.s32.totalorder %s230, %s233
      %p239 = scmp.eq.s32.totalorder %s35, 0
      %p240 = por %p238, %p239
      %p241 = scmp.ne.s32.totalorder %s230, %s233
      %p242 = scmp.eq.s32.totalorder %s40, 1
      %p243 = por %p241, %p242
      %p244 = scmp.ne.s32.totalorder %s233, %s234
      %p245 = scmp.eq.s32.totalorder %s40, 0
      %p246 = por %p244, %p245
      %p247 = scmp.ne.s32.totalorder %s233, %s234
      %p248 = scmp.eq.s32.totalorder %s41, 1
      %p249 = por %p247, %p248
      %p251 = scmp.ne.s32.totalorder %s234, %s250
      %p252 = scmp.eq.s32.totalorder %s41, 0
      %p253 = por %p251, %p252
      %s254 = ssub.s32 %s43, %s50
      %p255 = scmp.eq.s32.totalorder %s254, 0
      %s257 = sadd.s32 %s256, 1
      %s258 = scalar_select %p255, %s256, %s257
      %p261 = pneg %p255
      %p262 = scmp.eq.s32.totalorder %s35, 1
      %p263 = por %p261, %p262
      %p264 = scmp.ne.s32.totalorder %s256, %s259
      %p265 = scmp.eq.s32.totalorder %s35, 0
      %p266 = por %p264, %p265
      %p267 = scmp.ne.s32.totalorder %s256, %s259
      %p268 = scmp.eq.s32.totalorder %s40, 1
      %p269 = por %p267, %p268
      %p270 = scmp.ne.s32.totalorder %s259, %s260
      %p271 = scmp.eq.s32.totalorder %s40, 0
      %p272 = por %p270, %p271
      %p273 = scmp.ne.s32.totalorder %s259, %s260
      %p274 = scmp.eq.s32.totalorder %s41, 1
      %p275 = por %p273, %p274
      %p277 = scmp.ne.s32.totalorder %s260, %s276
      %p278 = scmp.eq.s32.totalorder %s41, 0
      %p279 = por %p277, %p278
      %s280 = ssub.s32 %s43, %s50
      %p281 = scmp.eq.s32.totalorder %s280, 0
      %s283 = sadd.s32 %s282, 1
      %s284 = scalar_select %p281, %s282, %s283
      %p287 = pneg %p281
      %p288 = scmp.eq.s32.totalorder %s35, 1
      %p289 = por %p287, %p288
      %p290 = scmp.ne.s32.totalorder %s282, %s285
      %p291 = scmp.eq.s32.totalorder %s35, 0
      %p292 = por %p290, %p291
      %p293 = scmp.ne.s32.totalorder %s282, %s285
      %p294 = scmp.eq.s32.totalorder %s40, 1
      %p295 = por %p293, %p294
      %p296 = scmp.ne.s32.totalorder %s285, %s286
      %p297 = scmp.eq.s32.totalorder %s40, 0
      %p298 = por %p296, %p297
      %p299 = scmp.ne.s32.totalorder %s285, %s286
      %p300 = scmp.eq.s32.totalorder %s41, 1
      %p301 = por %p299, %p300
      %p303 = scmp.ne.s32.totalorder %s286, %s302
      %p304 = scmp.eq.s32.totalorder %s41, 0
      %p305 = por %p303, %p304
      %s306 = ssub.s32 %s42, %s54
      %s307 = ssub.s32 %s43, %s50
      %s308 = sor.u32 %s306, %s307
      %p309 = scmp.eq.s32.totalorder %s308, 0
      %s311 = sadd.s32 %s310, 1
      %s312 = scalar_select %p309, %s310, %s311
      %p315 = pneg %p309
      %p316 = scmp.eq.s32.totalorder %s35, 1
      %p317 = por %p315, %p316
      %p318 = scmp.ne.s32.totalorder %s310, %s313
      %p319 = scmp.eq.s32.totalorder %s35, 0
      %p320 = por %p318, %p319
      %p321 = scmp.ne.s32.totalorder %s310, %s313
      %p322 = scmp.eq.s32.totalorder %s40, 1
      %p323 = por %p321, %p322
      %p324 = scmp.ne.s32.totalorder %s313, %s314
      %p325 = scmp.eq.s32.totalorder %s40, 0
      %p326 = por %p324, %p325
      %p327 = scmp.ne.s32.totalorder %s313, %s314
      %p328 = scmp.eq.s32.totalorder %s41, 1
      %p329 = por %p327, %p328
      %p331 = scmp.ne.s32.totalorder %s314, %s330
      %p332 = scmp.eq.s32.totalorder %s41, 0
      %p333 = por %p331, %p332
      %s334 = ssub.s32 %s42, %s54
      %s335 = ssub.s32 %s43, %s50
      %s336 = sor.u32 %s334, %s335
      %p337 = scmp.eq.s32.totalorder %s336, 0
      %s339 = sadd.s32 %s338, 1
      %s340 = scalar_select %p337, %s338, %s339
      %p343 = pneg %p337
      %p344 = scmp.eq.s32.totalorder %s35, 1
      %p345 = por %p343, %p344
      %p346 = scmp.ne.s32.totalorder %s338, %s341
      %p347 = scmp.eq.s32.totalorder %s35, 0
      %p348 = por %p346, %p347
      %p349 = scmp.ne.s32.totalorder %s338, %s341
      %p350 = scmp.eq.s32.totalorder %s40, 1
      %p351 = por %p349, %p350
      %p352 = scmp.ne.s32.totalorder %s341, %s342
      %p353 = scmp.eq.s32.totalorder %s40, 0
      %p354 = por %p352, %p353
      %p355 = scmp.ne.s32.totalorder %s341, %s342
      %p356 = scmp.eq.s32.totalorder %s41, 1
      %p357 = por %p355, %p356
      %p359 = scmp.ne.s32.totalorder %s342, %s358
      %p360 = scmp.eq.s32.totalorder %s41, 0
      %p361 = por %p359, %p360
      %s362 = ssub.s32 %s42, %s54
      %s363 = ssub.s32 %s43, %s50
      %s364 = sor.u32 %s362, %s363
      %p365 = scmp.eq.s32.totalorder %s364, 0
      %s367 = sadd.s32 %s366, 1
      %s368 = scalar_select %p365, %s366, %s367
      %p371 = pneg %p365
      %p372 = scmp.eq.s32.totalorder %s35, 1
      %p373 = por %p371, %p372
      %p374 = scmp.ne.s32.totalorder %s366, %s369
      %p375 = scmp.eq.s32.totalorder %s35, 0
      %p376 = por %p374, %p375
      %p377 = scmp.ne.s32.totalorder %s366, %s369
      %p378 = scmp.eq.s32.totalorder %s40, 1
      %p379 = por %p377, %p378
      %p380 = scmp.ne.s32.totalorder %s369, %s370
      %p381 = scmp.eq.s32.totalorder %s40, 0
      %p382 = por %p380, %p381
      %p383 = scmp.ne.s32.totalorder %s369, %s370
      %p384 = scmp.eq.s32.totalorder %s41, 1
      %p385 = por %p383, %p384
      %p387 = scmp.ne.s32.totalorder %s370, %s386
      %p388 = scmp.eq.s32.totalorder %s41, 0
      %p389 = por %p387, %p388
      %p390 = scmp.le.s32.totalorder 1, %s35
      %p391 = scmp.lt.s32.totalorder %s35, 3
      %p392 = pnand %p390, %p391
      %p393 = pneg %p392
      // Predicated region
      $region9: #{tpu_custom_call.1} parent=5 // pred_check
        _
      $region10: #{tpu_custom_call.1} parent=5 // pred_check_branch
        %395 = sbr.rel (%p392) target = $region12
      $region11: #{tpu_custom_call.1} parent=5 // pred_region
        %s396 = ssub.s32 %s35, 1
        // Predicated region
        $region13: #{tpu_custom_call.1} parent=11 // pred_check
          %p397 = pneg %p152
        $region14: #{tpu_custom_call.1} parent=11 // pred_check_branch
          %399 = sbr.rel (%p397) target = $region16
        $region15: #{tpu_custom_call.1} parent=11 // pred_region
          %s401 = ssub.s32 256, 256
          %402 = vsyncadd [#allocation9], %s401
          %s403 = sshll.u32 [#allocation8], 4
          %s404 = int_to_ptr.vmem [resolvable:$true] %s403
          %409 = dma.hbm_to_vmem [thread:$0]  %s3, 256, %s404, [#allocation9], 64, 64, 4
        $region16: #{tpu_custom_call.1} parent=11 // pred_fallthru
          _
        // Predicated region
        $region17: #{tpu_custom_call.1} parent=11 // pred_check
          %p410 = pneg %p173
        $region18: #{tpu_custom_call.1} parent=11 // pred_check_branch
          %412 = sbr.rel (%p410) target = $region20
        $region19: #{tpu_custom_call.1} parent=11 // pred_region
          %s414 = ssub.s32 256, 256
          %415 = vsyncadd [#allocation9], %s414
          %s416 = sshll.u32 [#allocation10], 4
          %s417 = int_to_ptr.vmem [resolvable:$true] %s416
          %422 = dma.hbm_to_vmem [thread:$0]  %s4, 256, %s417, [#allocation9], 64, 64, 4
        $region20: #{tpu_custom_call.1} parent=11 // pred_fallthru
          _
        // Predicated region
        $region21: #{tpu_custom_call.1} parent=11 // pred_check
          %p423 = pneg %p194
        $region22: #{tpu_custom_call.1} parent=11 // pred_check_branch
          %425 = sbr.rel (%p423) target = $region24
        $region23: #{tpu_custom_call.1} parent=11 // pred_region
          %s427 = ssub.s32 256, 256
          %428 = vsyncadd [#allocation12], %s427
          %s429 = sshll.u32 [#allocation11], 4
          %s430 = int_to_ptr.vmem [resolvable:$true] %s429
          %435 = dma.hbm_to_vmem [thread:$0]  %s5, 256, %s430, [#allocation12], 64, 64, 4
        $region24: #{tpu_custom_call.1} parent=11 // pred_fallthru
          _
        // Predicated region
        $region25: #{tpu_custom_call.1} parent=11 // pred_check
          %p436 = pneg %p220
        $region26: #{tpu_custom_call.1} parent=11 // pred_check_branch
          %438 = sbr.rel (%p436) target = $region28
        $region27: #{tpu_custom_call.1} parent=11 // pred_region
          %s440 = ssub.s32 128, 128
          %441 = vsyncadd [#allocation12], %s440
          %s442 = smul.addr %s45, 128
          %s443 = scalar_lea.hbm %s6, %s442
          %s445 = sshll.u32 [#allocation13], 4
          %s446 = int_to_ptr.vmem [resolvable:$true] %s445
          %448 = dma.hbm_to_vmem [thread:$0]  %s443, 128, %s446, [#allocation12]
        $region28: #{tpu_custom_call.1} parent=11 // pred_fallthru
          _
        // Predicated region
        $region29: #{tpu_custom_call.1} parent=11 // pred_check
          %p449 = pneg %p246
        $region30: #{tpu_custom_call.1} parent=11 // pred_check_branch
          %451 = sbr.rel (%p449) target = $region32
        $region31: #{tpu_custom_call.1} parent=11 // pred_region
          %s453 = ssub.s32 128, 128
          %454 = vsyncadd [#allocation15], %s453
          %s455 = smul.addr %s45, 128
          %s456 = scalar_lea.hbm %s7, %s455
          %s458 = sshll.u32 [#allocation14], 4
          %s459 = int_to_ptr.vmem [resolvable:$true] %s458
          %461 = dma.hbm_to_vmem [thread:$0]  %s456, 128, %s459, [#allocation15]
        $region32: #{tpu_custom_call.1} parent=11 // pred_fallthru
          _
        // Predicated region
        $region33: #{tpu_custom_call.1} parent=11 // pred_check
          %p462 = pneg %p272
        $region34: #{tpu_custom_call.1} parent=11 // pred_check_branch
          %464 = sbr.rel (%p462) target = $region36
        $region35: #{tpu_custom_call.1} parent=11 // pred_region
          %s466 = ssub.s32 128, 128
          %467 = vsyncadd [#allocation15], %s466
          %s468 = smul.addr %s45, 128
          %s469 = scalar_lea.hbm %s8, %s468
          %s471 = sshll.u32 [#allocation16], 4
          %s472 = int_to_ptr.vmem [resolvable:$true] %s471
          %474 = dma.hbm_to_vmem [thread:$0]  %s469, 128, %s472, [#allocation15]
        $region36: #{tpu_custom_call.1} parent=11 // pred_fallthru
          _
        // Predicated region
        $region37: #{tpu_custom_call.1} parent=11 // pred_check
          %p475 = pneg %p298
        $region38: #{tpu_custom_call.1} parent=11 // pred_check_branch
          %477 = sbr.rel (%p475) target = $region40
        $region39: #{tpu_custom_call.1} parent=11 // pred_region
          %s479 = ssub.s32 128, 128
          %480 = vsyncadd [#allocation18], %s479
          %s481 = smul.addr %s45, 128
          %s482 = scalar_lea.hbm %s9, %s481
          %s484 = sshll.u32 [#allocation17], 4
          %s485 = int_to_ptr.vmem [resolvable:$true] %s484
          %487 = dma.hbm_to_vmem [thread:$0]  %s482, 128, %s485, [#allocation18]
        $region40: #{tpu_custom_call.1} parent=11 // pred_fallthru
          _
      $region12: #{tpu_custom_call.1} parent=5 // pred_fallthru
        _
      %p488 = scmp.lt.s32.totalorder %s35, 2
      // Predicated region
      $region41: #{tpu_custom_call.1} parent=5 // pred_check
        %p489 = pneg %p488
      $region42: #{tpu_custom_call.1} parent=5 // pred_check_branch
        %491 = sbr.rel (%p489) target = $region44
      $region43: #{tpu_custom_call.1} parent=5 // pred_region
        // Predicated region
        $region45: #{tpu_custom_call.1} parent=43 // pred_check
          %p492 = pneg %p69
        $region46: #{tpu_custom_call.1} parent=43 // pred_check_branch
          %494 = sbr.rel (%p492) target = $region48
        $region47: #{tpu_custom_call.1} parent=43 // pred_region
          %s495 = sand.u32 %s59, 1
          %s496 = scalar_lea.sflag [#allocation3], %s495
          %s497 = sand.u32 %s59, 1
          %s498 = smul.addr %s497, 8
          %s499 = scalar_lea.vmem [#allocation2], %s498
          %s501 = ssub.s32 128, 128
          %502 = vsyncadd %s496, %s501
          %s503 = sadd.s32 %s43, %s42
          %s504 = smul.addr %s503, 128
          %s505 = scalar_lea.hbm %s0, %s504
          %s507 = sshll.u32 %s499, 4
          %s508 = int_to_ptr.vmem [resolvable:$true] %s507
          %510 = dma.hbm_to_vmem [thread:$0]  %s505, 128, %s508, %s496
        $region48: #{tpu_custom_call.1} parent=43 // pred_fallthru
          _
        // Predicated region
        $region49: #{tpu_custom_call.1} parent=43 // pred_check
          %p511 = pneg %p97
        $region50: #{tpu_custom_call.1} parent=43 // pred_check_branch
          %513 = sbr.rel (%p511) target = $region52
        $region51: #{tpu_custom_call.1} parent=43 // pred_region
          %s514 = sand.u32 %s35, 1
          %s515 = scalar_lea.sflag [#allocation6], %s514
          %s516 = sand.u32 %s87, 1
          %s517 = smul.addr %s516, 8
          %s518 = scalar_lea.vmem [#allocation5], %s517
          %s520 = ssub.s32 128, 128
          %521 = vsyncadd %s515, %s520
          %s522 = sadd.s32 %s43, %s42
          %s523 = smul.addr %s522, 128
          %s524 = scalar_lea.hbm %s1, %s523
          %s526 = sshll.u32 %s518, 4
          %s527 = int_to_ptr.vmem [resolvable:$true] %s526
          %529 = dma.hbm_to_vmem [thread:$0]  %s524, 128, %s527, %s515
        $region52: #{tpu_custom_call.1} parent=43 // pred_fallthru
          _
        // Predicated region
        $region53: #{tpu_custom_call.1} parent=43 // pred_check
          %p530 = pneg %p125
        $region54: #{tpu_custom_call.1} parent=43 // pred_check_branch
          %532 = sbr.rel (%p530) target = $region56
        $region55: #{tpu_custom_call.1} parent=43 // pred_region
          %s533 = sand.u32 %s35, 1
          %s534 = scalar_lea.sflag [#allocation6], %s533
          %s535 = sand.u32 %s115, 1
          %s536 = smul.addr %s535, 8
          %s537 = scalar_lea.vmem [#allocation7], %s536
          %s539 = ssub.s32 128, 128
          %540 = vsyncadd %s534, %s539
          %s541 = sadd.s32 %s43, %s42
          %s542 = smul.addr %s541, 128
          %s543 = scalar_lea.hbm %s2, %s542
          %s545 = sshll.u32 %s537, 4
          %s546 = int_to_ptr.vmem [resolvable:$true] %s545
          %548 = dma.hbm_to_vmem [thread:$0]  %s543, 128, %s546, %s534
        $region56: #{tpu_custom_call.1} parent=43 // pred_fallthru
          _
      $region44: #{tpu_custom_call.1} parent=5 // pred_fallthru
        _
      %p549 = scmp.le.s32.totalorder 1, %s35
      %p550 = scmp.lt.s32.totalorder %s35, 3
      %p551 = pnand %p549, %p550
      %p552 = pneg %p551
      // Predicated region
      $region57: #{tpu_custom_call.1} parent=5 // pred_check
        _
      $region58: #{tpu_custom_call.1} parent=5 // pred_check_branch
        %554 = sbr.rel (%p551) target = $region60
      $region59: #{tpu_custom_call.1} parent=5 // pred_region
        %s555 = ssub.s32 %s35, 1
        %s556 = sand.u32 %s62, 1
        %s557 = scalar_lea.sflag [#allocation3], %s556
        %s558 = sand.u32 %s62, 1
        %s559 = smul.addr %s558, 8
        %s560 = scalar_lea.vmem [#allocation2], %s559
        // Predicated region
        $region61: #{tpu_custom_call.1} parent=59 // pred_check
          %p561 = pneg %p75
        $region62: #{tpu_custom_call.1} parent=59 // pred_check_branch
          %563 = sbr.rel (%p561) target = $region64
        $region63: #{tpu_custom_call.1} parent=59 // pred_region
          %564 = dma.done %s557, 128
        $region64: #{tpu_custom_call.1} parent=59 // pred_fallthru
          _
        %s565 = sand.u32 %s40, 1
        %s566 = scalar_lea.sflag [#allocation6], %s565
        %s567 = sand.u32 %s90, 1
        %s568 = smul.addr %s567, 8
        %s569 = scalar_lea.vmem [#allocation5], %s568
        // Predicated region
        $region65: #{tpu_custom_call.1} parent=59 // pred_check
          %p570 = pneg %p103
        $region66: #{tpu_custom_call.1} parent=59 // pred_check_branch
          %572 = sbr.rel (%p570) target = $region68
        $region67: #{tpu_custom_call.1} parent=59 // pred_region
          %573 = dma.done %s566, 128
        $region68: #{tpu_custom_call.1} parent=59 // pred_fallthru
          _
        %s574 = sand.u32 %s40, 1
        %s575 = scalar_lea.sflag [#allocation6], %s574
        %s576 = sand.u32 %s118, 1
        %s577 = smul.addr %s576, 8
        %s578 = scalar_lea.vmem [#allocation7], %s577
        // Predicated region
        $region69: #{tpu_custom_call.1} parent=59 // pred_check
          %p579 = pneg %p131
        $region70: #{tpu_custom_call.1} parent=59 // pred_check_branch
          %581 = sbr.rel (%p579) target = $region72
        $region71: #{tpu_custom_call.1} parent=59 // pred_region
          %582 = dma.done %s575, 128
        $region72: #{tpu_custom_call.1} parent=59 // pred_fallthru
          _
        // Predicated region
        $region73: #{tpu_custom_call.1} parent=59 // pred_check
          %p583 = pneg %p152
        $region74: #{tpu_custom_call.1} parent=59 // pred_check_branch
          %585 = sbr.rel (%p583) target = $region76
        $region75: #{tpu_custom_call.1} parent=59 // pred_region
          %586 = dma.done [#allocation9], 256
        $region76: #{tpu_custom_call.1} parent=59 // pred_fallthru
          _
        // Predicated region
        $region77: #{tpu_custom_call.1} parent=59 // pred_check
          %p587 = pneg %p173
        $region78: #{tpu_custom_call.1} parent=59 // pred_check_branch
          %589 = sbr.rel (%p587) target = $region80
        $region79: #{tpu_custom_call.1} parent=59 // pred_region
          %590 = dma.done [#allocation9], 256
        $region80: #{tpu_custom_call.1} parent=59 // pred_fallthru
          _
        // Predicated region
        $region81: #{tpu_custom_call.1} parent=59 // pred_check
          %p591 = pneg %p194
        $region82: #{tpu_custom_call.1} parent=59 // pred_check_branch
          %593 = sbr.rel (%p591) target = $region84
        $region83: #{tpu_custom_call.1} parent=59 // pred_region
          %594 = dma.done [#allocation12], 256
        $region84: #{tpu_custom_call.1} parent=59 // pred_fallthru
          _
        // Predicated region
        $region85: #{tpu_custom_call.1} parent=59 // pred_check
          %p595 = pneg %p220
        $region86: #{tpu_custom_call.1} parent=59 // pred_check_branch
          %597 = sbr.rel (%p595) target = $region88
        $region87: #{tpu_custom_call.1} parent=59 // pred_region
          %598 = dma.done [#allocation12], 128
        $region88: #{tpu_custom_call.1} parent=59 // pred_fallthru
          _
        // Predicated region
        $region89: #{tpu_custom_call.1} parent=59 // pred_check
          %p599 = pneg %p246
        $region90: #{tpu_custom_call.1} parent=59 // pred_check_branch
          %601 = sbr.rel (%p599) target = $region92
        $region91: #{tpu_custom_call.1} parent=59 // pred_region
          %602 = dma.done [#allocation15], 128
        $region92: #{tpu_custom_call.1} parent=59 // pred_fallthru
          _
        // Predicated region
        $region93: #{tpu_custom_call.1} parent=59 // pred_check
          %p603 = pneg %p272
        $region94: #{tpu_custom_call.1} parent=59 // pred_check_branch
          %605 = sbr.rel (%p603) target = $region96
        $region95: #{tpu_custom_call.1} parent=59 // pred_region
          %606 = dma.done [#allocation15], 128
        $region96: #{tpu_custom_call.1} parent=59 // pred_fallthru
          _
        // Predicated region
        $region97: #{tpu_custom_call.1} parent=59 // pred_check
          %p607 = pneg %p298
        $region98: #{tpu_custom_call.1} parent=59 // pred_check_branch
          %609 = sbr.rel (%p607) target = $region100
        $region99: #{tpu_custom_call.1} parent=59 // pred_region
          %610 = dma.done [#allocation18], 128
        $region100: #{tpu_custom_call.1} parent=59 // pred_fallthru
          _
        %s611 = sand.u32 %s62, 1
        %s612 = scalar_lea.sflag [#allocation3], %s611
        %s613 = sand.u32 %s62, 1
        %s614 = smul.addr %s613, 8
        %s615 = scalar_lea.vmem [#allocation2], %s614
        %p616 = pneg %p75
        %p617 = pneg %p72
        %s618 = sand.u32 %s40, 1
        %s619 = scalar_lea.sflag [#allocation6], %s618
        %s620 = sand.u32 %s90, 1
        %s621 = smul.addr %s620, 8
        %s622 = scalar_lea.vmem [#allocation5], %s621
        %p623 = pneg %p103
        %p624 = pneg %p100
        %s625 = sand.u32 %s40, 1
        %s626 = scalar_lea.sflag [#allocation6], %s625
        %s627 = sand.u32 %s118, 1
        %s628 = smul.addr %s627, 8
        %s629 = scalar_lea.vmem [#allocation7], %s628
        %p630 = pneg %p131
        %p631 = pneg %p128
        %p632 = pneg %p152
        %p633 = pneg %p149
        %p634 = pneg %p173
        %p635 = pneg %p170
        %p636 = pneg %p194
        %p637 = pneg %p191
        %p638 = pneg %p220
        %p639 = pneg %p217
        %p640 = pneg %p246
        %p641 = pneg %p243
        %p642 = pneg %p272
        %p643 = pneg %p269
        %p644 = pneg %p298
        %p645 = pneg %p295
        %p646 = pneg %p326
        %p647 = pneg %p323
        %s648 = sand.u32 %s313, 1
        %s649 = scalar_lea.sflag [#allocation4], %s648
        %s650 = sand.u32 %s313, 1
        %s651 = smul.addr %s650, 4
        %s652 = scalar_lea.vmem [#allocation19], %s651
        %p653 = pneg %p354
        %p654 = pneg %p351
        %s655 = sand.u32 %s40, 1
        %s656 = scalar_lea.sflag [#allocation21], %s655
        %s657 = sand.u32 %s341, 1
        %s658 = smul.addr %s657, 4
        %s659 = scalar_lea.vmem [#allocation20], %s658
        %p660 = pneg %p382
        %p661 = pneg %p379
        %s662 = sand.u32 %s40, 1
        %s663 = scalar_lea.sflag [#allocation21], %s662
        %s664 = sand.u32 %s369, 1
        %s665 = smul.addr %s664, 4
        %s666 = scalar_lea.vmem [#allocation22], %s665
        %v668 = vld [vmem:[%s560] sm:$0xff]
        %v669 = vpack.c.bf16 %v668, %v668
        %v670 = vld [vmem:[%s569] sm:$0xff]
        %v671 = vpack.c.bf16 %v670, %v670
        %v672 = vld [vmem:[%s578] sm:$0xff]
        %v673 = vpack.c.bf16 %v672, %v672
        %v674 = vld [vmem:[#allocation8] sm:$0xf]
        %v675 = vld [vmem:[#allocation8 + $0x4] sm:$0xf]
        %v676 = vld [vmem:[#allocation8 + $0x8] sm:$0xf]
        %v677 = vld [vmem:[#allocation8 + $0xc] sm:$0xf]
        %v682 = vunpack.c.l.b16 %v674
        %v683 = vunpack.c.l.b16 %v675
        %v684 = vunpack.c.l.b16 %v676
        %v685 = vunpack.c.l.b16 %v677
        %v686 = vpack.c.b16 %v683, %v682
        %v687 = vpack.c.b16 %v685, %v684
        %vm690 = vcmask 261120
        %v692 = vsel %vm690, %v669, 0
        %694 = vmatprep.subr.bf16.mxu0 0
        %695 = vmatpush1.bf16.msra.mxu0 %v686
        %696 = vmatprep.subr.bf16.mxu0 0
        %697 = vmatpush1.bf16.msra.mxu0 %v687
        %698 = vmatprep.subr.bf16.mxu0 0
        %699 = vmatpush1.bf16.msra.mxu0 0
        %700 = vmatprep.subr.bf16.mxu0 0
        %701 = vmatpush1.bf16.msra.mxu0 0
        %702 = vmatprep.subr.bf16.mxu0 0
        %703 = vmatpush1.bf16.msra.mxu0 0
        %704 = vmatprep.subr.bf16.mxu0 0
        %705 = vmatpush1.bf16.msra.mxu0 0
        %706 = vmatprep.subr.bf16.mxu0 0
        %707 = vmatpush1.bf16.msra.mxu0 0
        %708 = vmatprep.subr.bf16.mxu0 0
        %709 = vmatpush1.bf16.msra.mxu0 0
        %710 = vmatprep.subr.bf16.mxu0 0
        %711 = vmatpush1.bf16.msra.mxu0 0
        %712 = vmatprep.subr.bf16.mxu0 0
        %713 = vmatpush1.bf16.msra.mxu0 0
        %714 = vmatprep.subr.bf16.mxu0 0
        %715 = vmatpush1.bf16.msra.mxu0 0
        %716 = vmatprep.subr.bf16.mxu0 0
        %717 = vmatpush1.bf16.msra.mxu0 0
        %718 = vmatprep.subr.bf16.mxu0 0
        %719 = vmatpush1.bf16.msra.mxu0 0
        %720 = vmatprep.subr.bf16.mxu0 0
        %721 = vmatpush1.bf16.msra.mxu0 0
        %722 = vmatprep.subr.bf16.mxu0 0
        %723 = vmatpush1.bf16.msra.mxu0 0
        %724 = vmatprep.subr.bf16.mxu0 0
        %725 = vmatpush1.bf16.msra.mxu0 0
        %726 = vmatprep.mubr.bf16.mxu0 0
        %727 = vmatmul.mubr.bf16.gmra.mrb[0].mxu0 %v692
        %v728 = vpop.f32.mrb[0].mxu0
        %v729 = vadd.f32 0.0, %v728
        %v730 = vpop.f32.mrb[0].mxu0
        %v731 = vpop.f32.mrb[0].mxu0
        %v732 = vpop.f32.mrb[0].mxu0
        %733 = vdwg.mxu0
        %v734 = vld [vmem:[#allocation10] sm:$0xf]
        %v735 = vld [vmem:[#allocation10 + $0x4] sm:$0xf]
        %v736 = vld [vmem:[#allocation10 + $0x8] sm:$0xf]
        %v737 = vld [vmem:[#allocation10 + $0xc] sm:$0xf]
        %v742 = vunpack.c.l.b16 %v734
        %v743 = vunpack.c.l.b16 %v735
        %v744 = vunpack.c.l.b16 %v736
        %v745 = vunpack.c.l.b16 %v737
        %v746 = vpack.c.b16 %v743, %v742
        %v747 = vpack.c.b16 %v745, %v744
        %v751 = vsel %vm690, %v671, 0
        %753 = vmatprep.subr.bf16.mxu0 0
        %754 = vmatpush1.bf16.msra.mxu0 %v746
        %755 = vmatprep.subr.bf16.mxu0 0
        %756 = vmatpush1.bf16.msra.mxu0 %v747
        %757 = vmatprep.subr.bf16.mxu0 0
        %758 = vmatpush1.bf16.msra.mxu0 0
        %759 = vmatprep.subr.bf16.mxu0 0
        %760 = vmatpush1.bf16.msra.mxu0 0
        %761 = vmatprep.subr.bf16.mxu0 0
        %762 = vmatpush1.bf16.msra.mxu0 0
        %763 = vmatprep.subr.bf16.mxu0 0
        %764 = vmatpush1.bf16.msra.mxu0 0
        %765 = vmatprep.subr.bf16.mxu0 0
        %766 = vmatpush1.bf16.msra.mxu0 0
        %767 = vmatprep.subr.bf16.mxu0 0
        %768 = vmatpush1.bf16.msra.mxu0 0
        %769 = vmatprep.subr.bf16.mxu0 0
        %770 = vmatpush1.bf16.msra.mxu0 0
        %771 = vmatprep.subr.bf16.mxu0 0
        %772 = vmatpush1.bf16.msra.mxu0 0
        %773 = vmatprep.subr.bf16.mxu0 0
        %774 = vmatpush1.bf16.msra.mxu0 0
        %775 = vmatprep.subr.bf16.mxu0 0
        %776 = vmatpush1.bf16.msra.mxu0 0
        %777 = vmatprep.subr.bf16.mxu0 0
        %778 = vmatpush1.bf16.msra.mxu0 0
        %779 = vmatprep.subr.bf16.mxu0 0
        %780 = vmatpush1.bf16.msra.mxu0 0
        %781 = vmatprep.subr.bf16.mxu0 0
        %782 = vmatpush1.bf16.msra.mxu0 0
        %783 = vmatprep.subr.bf16.mxu0 0
        %784 = vmatpush1.bf16.msra.mxu0 0
        %785 = vmatprep.mubr.bf16.mxu0 0
        %786 = vmatmul.mubr.bf16.gmra.mrb[0].mxu0 %v751
        %v787 = vpop.f32.mrb[0].mxu0
        %v788 = vadd.f32 0.0, %v787
        %v789 = vpop.f32.mrb[0].mxu0
        %v790 = vpop.f32.mrb[0].mxu0
        %v791 = vpop.f32.mrb[0].mxu0
        %792 = vdwg.mxu0
        %v793 = vld [vmem:[#allocation11] sm:$0xf]
        %v794 = vld [vmem:[#allocation11 + $0x4] sm:$0xf]
        %v795 = vld [vmem:[#allocation11 + $0x8] sm:$0xf]
        %v796 = vld [vmem:[#allocation11 + $0xc] sm:$0xf]
        %v801 = vunpack.c.l.b16 %v793
        %v802 = vunpack.c.l.b16 %v794
        %v803 = vunpack.c.l.b16 %v795
        %v804 = vunpack.c.l.b16 %v796
        %v805 = vpack.c.b16 %v802, %v801
        %v806 = vpack.c.b16 %v804, %v803
        %v810 = vsel %vm690, %v673, 0
        %812 = vmatprep.subr.bf16.mxu0 0
        %813 = vmatpush1.bf16.msra.mxu0 %v805
        %814 = vmatprep.subr.bf16.mxu0 0
        %815 = vmatpush1.bf16.msra.mxu0 %v806
        %816 = vmatprep.subr.bf16.mxu0 0
        %817 = vmatpush1.bf16.msra.mxu0 0
        %818 = vmatprep.subr.bf16.mxu0 0
        %819 = vmatpush1.bf16.msra.mxu0 0
        %820 = vmatprep.subr.bf16.mxu0 0
        %821 = vmatpush1.bf16.msra.mxu0 0
        %822 = vmatprep.subr.bf16.mxu0 0
        %823 = vmatpush1.bf16.msra.mxu0 0
        %824 = vmatprep.subr.bf16.mxu0 0
        %825 = vmatpush1.bf16.msra.mxu0 0
        %826 = vmatprep.subr.bf16.mxu0 0
        %827 = vmatpush1.bf16.msra.mxu0 0
        %828 = vmatprep.subr.bf16.mxu0 0
        %829 = vmatpush1.bf16.msra.mxu0 0
        %830 = vmatprep.subr.bf16.mxu0 0
        %831 = vmatpush1.bf16.msra.mxu0 0
        %832 = vmatprep.subr.bf16.mxu0 0
        %833 = vmatpush1.bf16.msra.mxu0 0
        %834 = vmatprep.subr.bf16.mxu0 0
        %835 = vmatpush1.bf16.msra.mxu0 0
        %836 = vmatprep.subr.bf16.mxu0 0
        %837 = vmatpush1.bf16.msra.mxu0 0
        %838 = vmatprep.subr.bf16.mxu0 0
        %839 = vmatpush1.bf16.msra.mxu0 0
        %840 = vmatprep.subr.bf16.mxu0 0
        %841 = vmatpush1.bf16.msra.mxu0 0
        %842 = vmatprep.subr.bf16.mxu0 0
        %843 = vmatpush1.bf16.msra.mxu0 0
        %844 = vmatprep.mubr.bf16.mxu0 0
        %845 = vmatmul.mubr.bf16.gmra.mrb[0].mxu0 %v810
        %v846 = vpop.f32.mrb[0].mxu0
        %v847 = vadd.f32 0.0, %v846
        %v848 = vpop.f32.mrb[0].mxu0
        %v849 = vpop.f32.mrb[0].mxu0
        %v850 = vpop.f32.mrb[0].mxu0
        %851 = vdwg.mxu0
        %v852 = vpack.c.bf16 %v847, %v847
        %vm853 = vcmask 257024
        %854 = vst.msk [vmem:[%s666] sm:$0xf] %vm853, %v852
        %v855 = vld [vmem:[#allocation13] sm:$0xff]
        %v856 = vld [vmem:[#allocation14] sm:$0xff]
        %v857 = vld [vmem:[#allocation16] sm:$0xff]
        %v858 = vld [vmem:[#allocation17] sm:$0xff]
        %v859 = vmul.f32 %v729, %v855
        %861 = vrot.lane.b32.xlu0 %v856, 4
        %v862 = vpop.permute.xlu0 %861
        %v864 = vmul.f32 %v729, %v862
        %866 = vrot.lane.b32.xlu0 %v864, 124
        %v867 = vpop.permute.xlu0 %866
        %v869 = vsub.f32 %v859, %v867
        %871 = vrot.lane.b32.xlu0 %v855, 4
        %v872 = vpop.permute.xlu0 %871
        %v874 = vmul.f32 %v729, %v872
        %v875 = vmul.f32 %v729, %v856
        %877 = vrot.lane.b32.xlu0 %v875, 4
        %v878 = vpop.permute.xlu0 %877
        %v880 = vadd.f32 %v874, %v878
        %v881 = vmul.f32 %v788, %v857
        %883 = vrot.lane.b32.xlu0 %v858, 4
        %v884 = vpop.permute.xlu0 %883
        %v886 = vmul.f32 %v788, %v884
        %888 = vrot.lane.b32.xlu0 %v886, 124
        %v889 = vpop.permute.xlu0 %888
        %v891 = vsub.f32 %v881, %v889
        %893 = vrot.lane.b32.xlu0 %v857, 4
        %v894 = vpop.permute.xlu0 %893
        %v896 = vmul.f32 %v788, %v894
        %v897 = vmul.f32 %v788, %v858
        %899 = vrot.lane.b32.xlu0 %v897, 4
        %v900 = vpop.permute.xlu0 %899
        %v902 = vadd.f32 %v896, %v900
        %903 = vrot.lane.b32.xlu0 %v855, 8
        %v904 = vpop.permute.xlu0 %903
        %v906 = vmul.f32 %v729, %v904
        %907 = vrot.lane.b32.xlu0 %v856, 12
        %v908 = vpop.permute.xlu0 %907
        %v910 = vmul.f32 %v729, %v908
        %912 = vrot.lane.b32.xlu0 %v910, 124
        %v913 = vpop.permute.xlu0 %912
        %v915 = vsub.f32 %v906, %v913
        %916 = vrot.lane.b32.xlu0 %v855, 12
        %v917 = vpop.permute.xlu0 %916
        %v919 = vmul.f32 %v729, %v917
        %920 = vrot.lane.b32.xlu0 %v856, 8
        %v921 = vpop.permute.xlu0 %920
        %v923 = vmul.f32 %v729, %v921
        %925 = vrot.lane.b32.xlu0 %v923, 4
        %v926 = vpop.permute.xlu0 %925
        %v928 = vadd.f32 %v919, %v926
        %929 = vrot.lane.b32.xlu0 %v857, 8
        %v930 = vpop.permute.xlu0 %929
        %v932 = vmul.f32 %v788, %v930
        %933 = vrot.lane.b32.xlu0 %v858, 12
        %v934 = vpop.permute.xlu0 %933
        %v936 = vmul.f32 %v788, %v934
        %938 = vrot.lane.b32.xlu0 %v936, 124
        %v939 = vpop.permute.xlu0 %938
        %v941 = vsub.f32 %v932, %v939
        %942 = vrot.lane.b32.xlu0 %v857, 12
        %v943 = vpop.permute.xlu0 %942
        %v945 = vmul.f32 %v788, %v943
        %946 = vrot.lane.b32.xlu0 %v858, 8
        %v947 = vpop.permute.xlu0 %946
        %v949 = vmul.f32 %v788, %v947
        %951 = vrot.lane.b32.xlu0 %v949, 4
        %v952 = vpop.permute.xlu0 %951
        %v954 = vadd.f32 %v945, %v952
        %955 = vrot.lane.b32.xlu0 %v855, 16
        %v956 = vpop.permute.xlu0 %955
        %v958 = vmul.f32 %v729, %v956
        %959 = vrot.lane.b32.xlu0 %v856, 20
        %v960 = vpop.permute.xlu0 %959
        %v962 = vmul.f32 %v729, %v960
        %964 = vrot.lane.b32.xlu0 %v962, 124
        %v965 = vpop.permute.xlu0 %964
        %v967 = vsub.f32 %v958, %v965
        %968 = vrot.lane.b32.xlu0 %v855, 20
        %v969 = vpop.permute.xlu0 %968
        %v971 = vmul.f32 %v729, %v969
        %972 = vrot.lane.b32.xlu0 %v856, 16
        %v973 = vpop.permute.xlu0 %972
        %v975 = vmul.f32 %v729, %v973
        %977 = vrot.lane.b32.xlu0 %v975, 4
        %v978 = vpop.permute.xlu0 %977
        %v980 = vadd.f32 %v971, %v978
        %981 = vrot.lane.b32.xlu0 %v857, 16
        %v982 = vpop.permute.xlu0 %981
        %v984 = vmul.f32 %v788, %v982
        %985 = vrot.lane.b32.xlu0 %v858, 20
        %v986 = vpop.permute.xlu0 %985
        %v988 = vmul.f32 %v788, %v986
        %990 = vrot.lane.b32.xlu0 %v988, 124
        %v991 = vpop.permute.xlu0 %990
        %v993 = vsub.f32 %v984, %v991
        %994 = vrot.lane.b32.xlu0 %v857, 20
        %v995 = vpop.permute.xlu0 %994
        %v997 = vmul.f32 %v788, %v995
        %998 = vrot.lane.b32.xlu0 %v858, 16
        %v999 = vpop.permute.xlu0 %998
        %v1001 = vmul.f32 %v788, %v999
        %1003 = vrot.lane.b32.xlu0 %v1001, 4
        %v1004 = vpop.permute.xlu0 %1003
        %v1006 = vadd.f32 %v997, %v1004
        %1007 = vrot.lane.b32.xlu0 %v855, 24
        %v1008 = vpop.permute.xlu0 %1007
        %v1010 = vmul.f32 %v729, %v1008
        %1011 = vrot.lane.b32.xlu0 %v856, 28
        %v1012 = vpop.permute.xlu0 %1011
        %v1014 = vmul.f32 %v729, %v1012
        %1016 = vrot.lane.b32.xlu0 %v1014, 124
        %v1017 = vpop.permute.xlu0 %1016
        %v1019 = vsub.f32 %v1010, %v1017
        %1020 = vrot.lane.b32.xlu0 %v855, 28
        %v1021 = vpop.permute.xlu0 %1020
        %v1023 = vmul.f32 %v729, %v1021
        %1024 = vrot.lane.b32.xlu0 %v856, 24
        %v1025 = vpop.permute.xlu0 %1024
        %v1027 = vmul.f32 %v729, %v1025
        %1029 = vrot.lane.b32.xlu0 %v1027, 4
        %v1030 = vpop.permute.xlu0 %1029
        %v1032 = vadd.f32 %v1023, %v1030
        %1033 = vrot.lane.b32.xlu0 %v857, 24
        %v1034 = vpop.permute.xlu0 %1033
        %v1036 = vmul.f32 %v788, %v1034
        %1037 = vrot.lane.b32.xlu0 %v858, 28
        %v1038 = vpop.permute.xlu0 %1037
        %v1040 = vmul.f32 %v788, %v1038
        %1042 = vrot.lane.b32.xlu0 %v1040, 124
        %v1043 = vpop.permute.xlu0 %1042
        %v1045 = vsub.f32 %v1036, %v1043
        %1046 = vrot.lane.b32.xlu0 %v857, 28
        %v1047 = vpop.permute.xlu0 %1046
        %v1049 = vmul.f32 %v788, %v1047
        %1050 = vrot.lane.b32.xlu0 %v858, 24
        %v1051 = vpop.permute.xlu0 %1050
        %v1053 = vmul.f32 %v788, %v1051
        %1055 = vrot.lane.b32.xlu0 %v1053, 4
        %v1056 = vpop.permute.xlu0 %1055
        %v1058 = vadd.f32 %v1049, %v1056
        %vm1059 = vcmask 31744
        %v1060 = vsel %vm1059, %v869, %v880
        %vm1061 = vcmask 64512
        %v1062 = vsel %vm1061, %v1060, %v915
        %vm1063 = vcmask 97280
        %v1064 = vsel %vm1063, %v1062, %v928
        %vm1065 = vcmask 130048
        %v1066 = vsel %vm1065, %v1064, %v967
        %vm1067 = vcmask 162816
        %v1068 = vsel %vm1067, %v1066, %v980
        %vm1069 = vcmask 195584
        %v1070 = vsel %vm1069, %v1068, %v1019
        %vm1071 = vcmask 228352
        %v1072 = vsel %vm1071, %v1070, %v1032
        %v1073 = vpack.c.bf16 %v1072, %v1072
        %1074 = vst.msk [vmem:[%s652] sm:$0xf] %vm853, %v1073
        %v1075 = vsel %vm1059, %v891, %v902
        %v1076 = vsel %vm1061, %v1075, %v941
        %v1077 = vsel %vm1063, %v1076, %v954
        %v1078 = vsel %vm1065, %v1077, %v993
        %v1079 = vsel %vm1067, %v1078, %v1006
        %v1080 = vsel %vm1069, %v1079, %v1045
        %v1081 = vsel %vm1071, %v1080, %v1058
        %v1082 = vpack.c.bf16 %v1081, %v1081
        %1083 = vst.msk [vmem:[%s659] sm:$0xf] %vm853, %v1082
        %s1084 = sand.u32 %s313, 1
        %s1085 = scalar_lea.sflag [#allocation4], %s1084
        %s1086 = sand.u32 %s313, 1
        %s1087 = smul.addr %s1086, 4
        %s1088 = scalar_lea.vmem [#allocation19], %s1087
        %s1089 = sand.u32 %s40, 1
        %s1090 = scalar_lea.sflag [#allocation21], %s1089
        %s1091 = sand.u32 %s341, 1
        %s1092 = smul.addr %s1091, 4
        %s1093 = scalar_lea.vmem [#allocation20], %s1092
        %s1094 = sand.u32 %s40, 1
        %s1095 = scalar_lea.sflag [#allocation21], %s1094
        %s1096 = sand.u32 %s369, 1
        %s1097 = smul.addr %s1096, 4
        %s1098 = scalar_lea.vmem [#allocation22], %s1097
        // Predicated region
        $region101: #{tpu_custom_call.1} parent=59 // pred_check
          %p1099 = pneg %p323
        $region102: #{tpu_custom_call.1} parent=59 // pred_check_branch
          %1101 = sbr.rel (%p1099) target = $region104
        $region103: #{tpu_custom_call.1} parent=59 // pred_region
          %s1103 = ssub.s32 64, 64
          %1104 = vsyncadd %s1085, %s1103
          %s1105 = sadd.s32 %s45, %s44
          %s1106 = smul.addr %s1105, 64
          %s1107 = scalar_lea.hbm %s10, %s1106
          %s1109 = sshll.u32 %s1088, 4
          %s1110 = int_to_ptr.vmem [resolvable:$true] %s1109
          %1112 = dma.vmem_to_hbm [thread:$0]  %s1110, 64, %s1107, %s1085
        $region104: #{tpu_custom_call.1} parent=59 // pred_fallthru
          _
        // Predicated region
        $region105: #{tpu_custom_call.1} parent=59 // pred_check
          %p1113 = pneg %p351
        $region106: #{tpu_custom_call.1} parent=59 // pred_check_branch
          %1115 = sbr.rel (%p1113) target = $region108
        $region107: #{tpu_custom_call.1} parent=59 // pred_region
          %s1117 = ssub.s32 64, 64
          %1118 = vsyncadd %s1090, %s1117
          %s1119 = sadd.s32 %s45, %s44
          %s1120 = smul.addr %s1119, 64
          %s1121 = scalar_lea.hbm %s11, %s1120
          %s1123 = sshll.u32 %s1093, 4
          %s1124 = int_to_ptr.vmem [resolvable:$true] %s1123
          %1126 = dma.vmem_to_hbm [thread:$0]  %s1124, 64, %s1121, %s1090
        $region108: #{tpu_custom_call.1} parent=59 // pred_fallthru
          _
        // Predicated region
        $region109: #{tpu_custom_call.1} parent=59 // pred_check
          %p1127 = pneg %p379
        $region110: #{tpu_custom_call.1} parent=59 // pred_check_branch
          %1129 = sbr.rel (%p1127) target = $region112
        $region111: #{tpu_custom_call.1} parent=59 // pred_region
          %s1131 = ssub.s32 64, 64
          %1132 = vsyncadd %s1095, %s1131
          %s1133 = sadd.s32 %s45, %s44
          %s1134 = smul.addr %s1133, 64
          %s1135 = scalar_lea.hbm %s12, %s1134
          %s1137 = sshll.u32 %s1098, 4
          %s1138 = int_to_ptr.vmem [resolvable:$true] %s1137
          %1140 = dma.vmem_to_hbm [thread:$0]  %s1138, 64, %s1135, %s1095
        $region112: #{tpu_custom_call.1} parent=59 // pred_fallthru
          _
      $region60: #{tpu_custom_call.1} parent=5 // pred_fallthru
        _
      %p1141 = scmp.le.s32.totalorder 2, %s35
      // Predicated region
      $region113: #{tpu_custom_call.1} parent=5 // pred_check
        %p1142 = pneg %p1141
      $region114: #{tpu_custom_call.1} parent=5 // pred_check_branch
        %1144 = sbr.rel (%p1142) target = $region116
      $region115: #{tpu_custom_call.1} parent=5 // pred_region
        %s1145 = ssub.s32 %s35, 2
        // Predicated region
        $region117: #{tpu_custom_call.1} parent=115 // pred_check
          %p1146 = pneg %p329
        $region118: #{tpu_custom_call.1} parent=115 // pred_check_branch
          %1148 = sbr.rel (%p1146) target = $region120
        $region119: #{tpu_custom_call.1} parent=115 // pred_region
          %s1149 = sand.u32 %s314, 1
          %s1150 = scalar_lea.sflag [#allocation4], %s1149
          %s1151 = sand.u32 %s314, 1
          %s1152 = smul.addr %s1151, 4
          %s1153 = scalar_lea.vmem [#allocation19], %s1152
          %1154 = dma.done %s1150, 64
        $region120: #{tpu_custom_call.1} parent=115 // pred_fallthru
          _
        // Predicated region
        $region121: #{tpu_custom_call.1} parent=115 // pred_check
          %p1155 = pneg %p357
        $region122: #{tpu_custom_call.1} parent=115 // pred_check_branch
          %1157 = sbr.rel (%p1155) target = $region124
        $region123: #{tpu_custom_call.1} parent=115 // pred_region
          %s1158 = sand.u32 %s41, 1
          %s1159 = scalar_lea.sflag [#allocation21], %s1158
          %s1160 = sand.u32 %s342, 1
          %s1161 = smul.addr %s1160, 4
          %s1162 = scalar_lea.vmem [#allocation20], %s1161
          %1163 = dma.done %s1159, 64
        $region124: #{tpu_custom_call.1} parent=115 // pred_fallthru
          _
        // Predicated region
        $region125: #{tpu_custom_call.1} parent=115 // pred_check
          %p1164 = pneg %p385
        $region126: #{tpu_custom_call.1} parent=115 // pred_check_branch
          %1166 = sbr.rel (%p1164) target = $region128
        $region127: #{tpu_custom_call.1} parent=115 // pred_region
          %s1167 = sand.u32 %s41, 1
          %s1168 = scalar_lea.sflag [#allocation21], %s1167
          %s1169 = sand.u32 %s370, 1
          %s1170 = smul.addr %s1169, 4
          %s1171 = scalar_lea.vmem [#allocation22], %s1170
          %1172 = dma.done %s1168, 64
        $region128: #{tpu_custom_call.1} parent=115 // pred_fallthru
          _
      $region116: #{tpu_custom_call.1} parent=5 // pred_fallthru
        _
    $region6: #{tpu_custom_call.1} parent=1 // loop_footer
      %s39 = sadd.s32 1, %s35
    $region7: #{tpu_custom_call.1} parent=1 // loop_footer_branch
      %34 = sbr.rel target = $region3
    $region8: #{tpu_custom_call.1} parent=1 // loop_exit
      _
    %1173 = vsyncpa [#allocation3], 1
    %s1174 = scalar_lea.sflag [#allocation3], 1
    %1175 = vsyncpa %s1174, 1
    %1176 = vsyncpa [#allocation6], 1
    %s1177 = scalar_lea.sflag [#allocation6], 1
    %1178 = vsyncpa %s1177, 1
    %1179 = vsyncpa [#allocation9], 1
    %1180 = vsyncpa [#allocation12], 1
    %1181 = vsyncpa [#allocation15], 1
    %1182 = vsyncpa [#allocation18], 1
    %1183 = vsyncpa [#allocation4], 1
    %s1184 = scalar_lea.sflag [#allocation4], 1
    %1185 = vsyncpa %s1184, 1
    %1186 = vsyncpa [#allocation21], 1
    %s1187 = scalar_lea.sflag [#allocation21], 1
    %1188 = vsyncpa %s1187, 1

</llo_original>
